<compile_context>
chip_gen: v7x
topology: tpu7x:2x2x1
jax: 0.10.0
libtpu: 0.0.40
codegen_flags: <defaults>
</compile_context>

<pallas_src>
import functools

import jax
import jax.numpy as jnp
import numpy as np
from jax.experimental import pallas as pl
from jax.experimental.pallas import tpu as pltpu


def _round_up(x, m):
    return (x + m - 1) // m * m


# --------------------------- fused encoder kernel ---------------------------
def _encoder_kernel(n_head, n_layers, d_real, dh_p,
                    x_ref, mask_ref,
                    wqkv_ref, bqkv_ref, wo_ref, bo_ref,
                    ln1_g_ref, ln1_b_ref,
                    w1_ref, b1_ref, w2_ref, b2_ref,
                    ln2_g_ref, ln2_b_ref,
                    o_ref, y_ref):
    l = pl.program_id(1)
    NB, T, Dp = x_ref.shape
    H = n_head
    Hp = H * dh_p                     # == Dp (padded per-head layout)
    R = NB * T
    eps = 1e-5
    inv_d = 1.0 / float(d_real)

    # Seed the VMEM-resident activation with this batch block's input.
    @pl.when(l == 0)
    def _():
        y_ref[...] = x_ref[...]

    y = y_ref[...]                                   # (NB, T, Dp) f32
    rows = y.reshape(R, Dp)                          # fold batch into rows
    rows_b = rows.astype(jnp.bfloat16)

    # Validity mask over the real (un-padded) model lanes for LayerNorm stats.
    lane = jax.lax.broadcasted_iota(jnp.int32, (1, Dp), 1)
    dmask = (lane < d_real).astype(jnp.float32)

    # ---- fused, lane-dense QKV projection (1/sqrt(dh) pre-folded into q) ---
    qkv = (jnp.dot(rows_b, wqkv_ref[0], preferred_element_type=jnp.float32)
           + bqkv_ref[0]).astype(jnp.bfloat16)       # (R, 3*Hp)
    qb = qkv[:, 0 * Hp:1 * Hp]
    kb = qkv[:, 1 * Hp:2 * Hp]
    vb = qkv[:, 2 * Hp:3 * Hp]

    # Additive key-padding mask in f32, broadcast once (not once per head).
    mask_b = jnp.broadcast_to(mask_ref[...], (NB, T, T))

    # ---- per-head attention: only score/softmax/context stay per head ------
    # TODO(synk): for large n_head switch to lax.fori_loop + VMEM ctx scratch
    #             to bound per-head live ranges explicitly.
    ctx_parts = []
    for h in range(H):                               # static, small
        sl = slice(h * dh_p, (h + 1) * dh_p)
        qh = qb[:, sl].reshape(NB, T, dh_p)
        kh = kb[:, sl].reshape(NB, T, dh_p)
        vh = vb[:, sl].reshape(NB, T, dh_p)
        s = jnp.einsum('bqd,bkd->bqk', qh, kh,
                       preferred_element_type=jnp.float32)
        s = s + mask_b
        m = jnp.max(s, axis=-1, keepdims=True)
        p = jnp.exp(s - m)
        p = p * pl.reciprocal(jnp.sum(p, axis=-1, keepdims=True), approx=True)
        ctx = jnp.einsum('bqk,bkd->bqd', p.astype(jnp.bfloat16), vh,
                         preferred_element_type=jnp.float32)
        ctx_parts.append(ctx.reshape(R, dh_p))
    ctx_all = jnp.concatenate(ctx_parts, axis=-1).astype(jnp.bfloat16)

    # ---- single full-contraction out-projection over concatenated heads ----
    attn = (jnp.dot(ctx_all, wo_ref[0], preferred_element_type=jnp.float32)
            + bo_ref[0])

    def layer_norm(hid, g, b):
        mu = jnp.sum(hid, axis=-1, keepdims=True) * inv_d
        cen = (hid - mu) * dmask                     # ignore padded lanes
        var = jnp.sum(cen * cen, axis=-1, keepdims=True) * inv_d
        # gamma/beta are zero-padded -> padded output lanes stay exactly 0.
        return cen * jax.lax.rsqrt(var + eps) * g + b

    # ---- residual + LayerNorm 1 --------------------------------------------
    h1 = layer_norm(rows + attn, ln1_g_ref[0], ln1_b_ref[0])

    # ---- feed-forward (ReLU) -------------------------------------------------
    ff = (jnp.dot(h1.astype(jnp.bfloat16), w1_ref[0],
                  preferred_element_type=jnp.float32) + b1_ref[0])
    ff = jnp.maximum(ff, 0.0)
    ff = (jnp.dot(ff.astype(jnp.bfloat16), w2_ref[0],
                  preferred_element_type=jnp.float32) + b2_ref[0])

    # ---- residual + LayerNorm 2 ----------------------------------------------
    h2 = layer_norm(h1 + ff, ln2_g_ref[0], ln2_b_ref[0])
    y_ref[...] = h2.reshape(NB, T, Dp)

    # Module output: x + encoder(x), written once, on the last layer.
    @pl.when(l == n_layers - 1)
    def _():
        o_ref[...] = x_ref[...] + y_ref[...]


# ------------------------- host-side weight prep ---------------------------
def _prepare_params(params, n_head, d_p, dh_p, f_p):
    """Stack per-layer params, pre-transpose, pack QKV, zero-pad to lane-dense
    shapes, fold 1/sqrt(d_head) into Wq/bq, cast matmul operands to bf16 —
    all outside the kernel (free)."""
    D = params[0]["out_w"].shape[0]
    DFF = params[0]["ff1_w"].shape[0]
    H = n_head
    DH = D // H
    scale = 1.0 / float(DH) ** 0.5
    bf16 = jnp.bfloat16

    def head_proj_w(w, s):            # w: (D_out=D, D_in=D) torch layout
        wt = w.T.reshape(D, H, DH) * s                    # columns per head
        wt = jnp.pad(wt, ((0, d_p - D), (0, 0), (0, dh_p - DH)))
        return wt.reshape(d_p, H * dh_p)

    def head_proj_b(b, s):
        bb = b.reshape(H, DH) * s
        bb = jnp.pad(bb, ((0, 0), (0, dh_p - DH)))
        return bb.reshape(1, H * dh_p)

    def qkv_w(p):
        iw = p["in_w"]
        return jnp.concatenate([head_proj_w(iw[0:D], scale),
                                head_proj_w(iw[D:2 * D], 1.0),
                                head_proj_w(iw[2 * D:3 * D], 1.0)], axis=-1)

    def qkv_b(p):
        ib = p["in_b"].reshape(-1)
        return jnp.concatenate([head_proj_b(ib[0:D], scale),
                                head_proj_b(ib[D:2 * D], 1.0),
                                head_proj_b(ib[2 * D:3 * D], 1.0)], axis=-1)

    def out_w(p):                      # concat(ctx) @ out_w.T, head-ordered rows
        wt = p["out_w"].T.reshape(H, DH, D)
        wt = jnp.pad(wt, ((0, 0), (0, dh_p - DH), (0, d_p - D)))
        return wt.reshape(H * dh_p, d_p)

    def pad_vec(v, width):
        v = v.reshape(1, -1)
        return jnp.pad(v, ((0, 0), (0, width - v.shape[-1])))

    def stack(fn):
        return jnp.stack([fn(p) for p in params], axis=0)

    return dict(
        wqkv=stack(qkv_w).astype(bf16),
        bqkv=stack(qkv_b),
        wo=stack(out_w).astype(bf16),
        bo=stack(lambda p: pad_vec(p["out_b"], d_p)),
        ln1_g=stack(lambda p: pad_vec(p["ln1_g"], d_p)),
        ln1_b=stack(lambda p: pad_vec(p["ln1_b"], d_p)),
        w1=stack(lambda p: jnp.pad(p["ff1_w"].T,
                                   ((0, d_p - D), (0, f_p - DFF)))).astype(bf16),
        b1=stack(lambda p: pad_vec(p["ff1_b"], f_p)),
        w2=stack(lambda p: jnp.pad(p["ff2_w"].T,
                                   ((0, f_p - DFF), (0, d_p - D)))).astype(bf16),
        b2=stack(lambda p: pad_vec(p["ff2_b"], d_p)),
        ln2_g=stack(lambda p: pad_vec(p["ln2_g"], d_p)),
        ln2_b=stack(lambda p: pad_vec(p["ln2_b"], d_p)),
    )


# ------------------------- VMEM / block-size heuristics ---------------------
def _vmem_limit_bytes():
    """Scoped-VMEM request: ~3/4 of physical VMEM (96 MiB on v5e/v6e's
    128 MiB, 48 MiB on v7x's 64 MiB), conservative fallback if unknown."""
    try:
        cap = int(pltpu.get_tpu_info().vmem_capacity_bytes)
    except Exception:
        cap = 64 * 1024 * 1024
    return max(32 * 1024 * 1024, min(cap * 3 // 4, 112 * 1024 * 1024))


def _pick_block_n(n, t, d_p, f_p, vmem_limit, weight_bytes, min_batch_blocks=2):
    """Largest divisor NB of n whose per-step f32 activation footprint fits
    the budget left after double-buffered weights; prefer leaving >= 2 batch
    blocks so v7x's two TensorCores both get work on the 'parallel' axis."""
    act_budget = max(vmem_limit - 2 * weight_bytes, 4 * 1024 * 1024)

    def fits(nb):
        rows = nb * t
        act = 4 * (3 * nb * t * d_p          # x block, y scratch, rows
                   + 3 * rows * d_p          # q / k / v
                   + 2 * rows * d_p          # attn, h1
                   + rows * f_p              # ffn intermediate
                   + 3 * nb * t * t)         # one head's scores/probs + mask
        return 2 * act <= act_budget         # 2x: i/o double buffering + slack

    divs = [i for i in range(1, n + 1) if n % i == 0 and fits(i)] or [1]
    pref = [i for i in divs if n // i >= min_batch_blocks]
    return max(pref) if pref else max(divs)


# ------------------------------ forward pass -------------------------------
def transformer_encoder_forward(x_tnd, seq_length, params, n_head,
                                block_n=None):
    """x_tnd: [t, n, d] float32, seq_length: [n] int32.  Returns [t, n, d]."""
    T, N, D = x_tnd.shape
    assert D % n_head == 0, "d_model must be divisible by n_head"
    L = len(params)
    H = n_head
    DFF = params[0]["ff1_w"].shape[0]

    Dp = _round_up(D, 128)
    # TODO(synk): if n_head does not divide the 128-padded d_model, pad each
    #             head dim separately instead (not needed for typical configs).
    assert Dp % H == 0
    DHp = Dp // H
    Fp = _round_up(DFF, 128)

    x_ntd = jnp.transpose(x_tnd, (1, 0, 2)).astype(jnp.float32)
    x_ntd = jnp.pad(x_ntd, ((0, 0), (0, 0), (0, Dp - D)))

    pos = jnp.arange(T)
    padded = pos[None, :] >= seq_length[:, None]            # True -> masked key
    add_mask = jnp.where(padded, jnp.float32(-1e9),
                         jnp.float32(0.0)).reshape(N, 1, T)

    prep = _prepare_params(params, H, Dp, DHp, Fp)

    vmem_limit = _vmem_limit_bytes()
    weight_bytes = sum(int(np.prod(v.shape[1:])) * v.dtype.itemsize
                       for v in prep.values())
    NB = (block_n if block_n is not None
          else _pick_block_n(N, T, Dp, Fp, vmem_limit, weight_bytes))
    assert N % NB == 0

    xmap = lambda b, l: (b, 0, 0)
    wmap = lambda b, l: (l, 0, 0)

    in_specs = [
        pl.BlockSpec((NB, T, Dp), xmap),          # x (zero-padded lanes)
        pl.BlockSpec((NB, 1, T), xmap),           # additive key-padding mask
        pl.BlockSpec((1, Dp, 3 * Dp), wmap),      # wqkv (bf16, q pre-scaled)
        pl.BlockSpec((1, 1, 3 * Dp), wmap),       # bqkv
        pl.BlockSpec((1, Dp, Dp), wmap),          # wo
        pl.BlockSpec((1, 1, Dp), wmap),           # bo
        pl.BlockSpec((1, 1, Dp), wmap),           # ln1_g
        pl.BlockSpec((1, 1, Dp), wmap),           # ln1_b
        pl.BlockSpec((1, Dp, Fp), wmap),          # w1
        pl.BlockSpec((1, 1, Fp), wmap),           # b1
        pl.BlockSpec((1, Fp, Dp), wmap),          # w2
        pl.BlockSpec((1, 1, Dp), wmap),           # b2
        pl.BlockSpec((1, 1, Dp), wmap),           # ln2_g
        pl.BlockSpec((1, 1, Dp), wmap),           # ln2_b
    ]

    kernel = functools.partial(_encoder_kernel, H, L, D, DHp)
    out = pl.pallas_call(
        kernel,
        out_shape=jax.ShapeDtypeStruct((N, T, Dp), jnp.float32),
        grid=(N // NB, L),
        in_specs=in_specs,
        out_specs=pl.BlockSpec((NB, T, Dp), xmap),
        scratch_shapes=[pltpu.VMEM((NB, T, Dp), jnp.float32)],
        compiler_params=pltpu.CompilerParams(
            dimension_semantics=("parallel", "arbitrary"),
            vmem_limit_bytes=vmem_limit),
    )(x_ntd, add_mask,
      prep["wqkv"], prep["bqkv"], prep["wo"], prep["bo"],
      prep["ln1_g"], prep["ln1_b"],
      prep["w1"], prep["b1"], prep["w2"], prep["b2"],
      prep["ln2_g"], prep["ln2_b"])

    out = out[..., :D]                              # drop lane padding
    return jnp.transpose(out, (1, 0, 2))


# ------------------------- pure-JAX f32 reference --------------------------
def _reference_forward(x_tnd, seq_length, params, n_head):
    T, N, D = x_tnd.shape
    x = jnp.transpose(x_tnd, (1, 0, 2)).astype(jnp.float32)   # (N, T, D)
    pos = jnp.arange(T)
    add_mask = jnp.where(pos[None, :] >= seq_length[:, None], -1e9, 0.0)

    def ln(h, g, b):
        mu = jnp.mean(h, axis=-1, keepdims=True)
        var = jnp.mean((h - mu) ** 2, axis=-1, keepdims=True)
        return (h - mu) * jax.lax.rsqrt(var + 1e-5) * g + b

    y = x
    H, DH = n_head, D // n_head
    for p in params:
        qkv = jnp.einsum('ntd,ed->nte', y, p["in_w"]) + p["in_b"]
        q, k, v = qkv[..., :D], qkv[..., D:2 * D], qkv[..., 2 * D:]
        q = q.reshape(N, T, H, DH).transpose(0, 2, 1, 3)
        k = k.reshape(N, T, H, DH).transpose(0, 2, 1, 3)
        v = v.reshape(N, T, H, DH).transpose(0, 2, 1, 3)
        s = jnp.einsum('nhtd,nhsd->nhts', q, k) / (DH ** 0.5)
        s = s + add_mask[:, None, None, :]
        pmat = jax.nn.softmax(s, axis=-1)
        a = jnp.einsum('nhts,nhsd->nhtd', pmat, v)
        a = a.transpose(0, 2, 1, 3).reshape(N, T, D)
        a = jnp.einsum('ntd,ed->nte', a, p["out_w"]) + p["out_b"]
        h1 = ln(y + a, p["ln1_g"], p["ln1_b"])
        ff = jax.nn.relu(jnp.einsum('ntd,ed->nte', h1, p["ff1_w"]) + p["ff1_b"])
        ff = jnp.einsum('nte,de->ntd', ff, p["ff2_w"]) + p["ff2_b"]
        y = ln(h1 + ff, p["ln2_g"], p["ln2_b"])
    return jnp.transpose(x + y, (1, 0, 2))


# ------------------------------ parameter init -----------------------------
def init_params(key, d_model, d_ff, n_layers):
    params = []
    for l in range(n_layers):
        ks = jax.random.split(jax.random.fold_in(key, l), 6)

        def u(k, shape, fan_in):
            b = 1.0 / (fan_in ** 0.5)
            return jax.random.uniform(k, shape, jnp.float32, -b, b)

        params.append(dict(
            in_w=u(ks[0], (3 * d_model, d_model), d_model),
            in_b=jnp.zeros((1, 3 * d_model), jnp.float32),
            out_w=u(ks[1], (d_model, d_model), d_model),
            out_b=jnp.zeros((1, d_model), jnp.float32),
            ln1_g=jnp.ones((1, d_model), jnp.float32),
            ln1_b=jnp.zeros((1, d_model), jnp.float32),
            ff1_w=u(ks[2], (d_ff, d_model), d_model),
            ff1_b=u(ks[3], (1, d_ff), d_model),
            ff2_w=u(ks[4], (d_model, d_ff), d_ff),
            ff2_b=u(ks[5], (1, d_model), d_ff),
            ln2_g=jnp.ones((1, d_model), jnp.float32),
            ln2_b=jnp.zeros((1, d_model), jnp.float32),
        ))
    return params


if __name__ == "__main__":
    T, N, D = 8, 2, 32          # time, batch, d_model
    N_HEAD = 4
    D_FF = 64
    N_LAYERS = 2

    key = jax.random.PRNGKey(0)
    kx, kp = jax.random.split(key)
    x = jax.random.normal(kx, (T, N, D), jnp.float32)        # [t, n, d]
    seq_length = jnp.array([8, 5], jnp.int32)                 # [n]
    params = init_params(kp, D, D_FF, N_LAYERS)

    out = transformer_encoder_forward(x, seq_length, params, N_HEAD)
    out = jax.block_until_ready(out)
    assert out.shape == (T, N, D)

    ref = jax.block_until_ready(_reference_forward(x, seq_length, params, N_HEAD))
    # bf16 matmul operands + approx reciprocal -> slightly looser tolerance
    np.testing.assert_allclose(np.asarray(out), np.asarray(ref),
                               rtol=5e-2, atol=5e-2)
    print("KERNEL_OK")
</pallas_src>

<mosaic_0001>
module attributes {stable_mosaic.version = 11 : i64} {
  func.func @_encoder_kernel(%arg0: i32, %arg1: i32, %arg2: memref<1x8x128xf32, #tpu.memory_space<vmem>>, %arg3: memref<1x1x8xf32, #tpu.memory_space<vmem>>, %arg4: memref<1x128x384xbf16, #tpu.memory_space<vmem>>, %arg5: memref<1x1x384xf32, #tpu.memory_space<vmem>>, %arg6: memref<1x128x128xbf16, #tpu.memory_space<vmem>>, %arg7: memref<1x1x128xf32, #tpu.memory_space<vmem>>, %arg8: memref<1x1x128xf32, #tpu.memory_space<vmem>>, %arg9: memref<1x1x128xf32, #tpu.memory_space<vmem>>, %arg10: memref<1x128x128xbf16, #tpu.memory_space<vmem>>, %arg11: memref<1x1x128xf32, #tpu.memory_space<vmem>>, %arg12: memref<1x128x128xbf16, #tpu.memory_space<vmem>>, %arg13: memref<1x1x128xf32, #tpu.memory_space<vmem>>, %arg14: memref<1x1x128xf32, #tpu.memory_space<vmem>>, %arg15: memref<1x1x128xf32, #tpu.memory_space<vmem>>, %arg16: memref<1x8x128xf32, #tpu.memory_space<vmem>>, %arg17: memref<1x8x128xf32, #tpu.memory_space<vmem>>) attributes {dimension_semantics = [#tpu.dimension_semantics<parallel>, #tpu.dimension_semantics<arbitrary>], iteration_bounds = array<i64: 2, 2>, scalar_prefetch = 0 : i64, scratch_operands = 1 : i64, tpu.core_type = #tpu.core_type<tc>, window_params = [{transform_indices = @transform_0, window_bounds = array<i64: 1, 8, 128>}, {transform_indices = @transform_1, window_bounds = array<i64: 1, 1, 8>}, {transform_indices = @transform_2, window_bounds = array<i64: 1, 128, 384>}, {transform_indices = @transform_3, window_bounds = array<i64: 1, 1, 384>}, {transform_indices = @transform_4, window_bounds = array<i64: 1, 128, 128>}, {transform_indices = @transform_5, window_bounds = array<i64: 1, 1, 128>}, {transform_indices = @transform_6, window_bounds = array<i64: 1, 1, 128>}, {transform_indices = @transform_7, window_bounds = array<i64: 1, 1, 128>}, {transform_indices = @transform_8, window_bounds = array<i64: 1, 128, 128>}, {transform_indices = @transform_9, window_bounds = array<i64: 1, 1, 128>}, {transform_indices = @transform_10, window_bounds = array<i64: 1, 128, 128>}, {transform_indices = @transform_11, window_bounds = array<i64: 1, 1, 128>}, {transform_indices = @transform_12, window_bounds = array<i64: 1, 1, 128>}, {transform_indices = @transform_13, window_bounds = array<i64: 1, 1, 128>}, {transform_indices = @transform_14, window_bounds = array<i64: 1, 8, 128>}]} {
    %c0_i32 = arith.constant 0 : i32
    %0 = arith.cmpi eq, %arg1, %c0_i32 : i32
    %1 = arith.extui %0 : i1 to i32
    %c0_i32_0 = arith.constant 0 : i32
    %2 = arith.cmpi ne, %1, %c0_i32_0 : i32
    scf.if %2 {
      %c0_76 = arith.constant 0 : index
      %c0_77 = arith.constant 0 : index
      %c0_78 = arith.constant 0 : index
      %195 = vector.load %arg2[%c0_76, %c0_77, %c0_78] : memref<1x8x128xf32, #tpu.memory_space<vmem>>, vector<1x8x128xf32>
      %c0_79 = arith.constant 0 : index
      %c0_80 = arith.constant 0 : index
      %c0_81 = arith.constant 0 : index
      %196 = vector.load %arg17[%c0_79, %c0_80, %c0_81] : memref<1x8x128xf32, #tpu.memory_space<vmem>>, vector<1x8x128xf32>
      tpu.vector_store %arg17[%c0_79, %c0_80, %c0_81], %195 {strides = array<i32>} : memref<1x8x128xf32, #tpu.memory_space<vmem>>, vector<1x8x128xf32>,
    } else {
    }
    %c0 = arith.constant 0 : index
    %c0_1 = arith.constant 0 : index
    %c0_2 = arith.constant 0 : index
    %3 = vector.load %arg17[%c0, %c0_1, %c0_2] : memref<1x8x128xf32, #tpu.memory_space<vmem>>, vector<1x8x128xf32>
    %4 = vector.shape_cast %3 : vector<1x8x128xf32> to vector<8x128xf32>
    %5 = arith.truncf %4 : vector<8x128xf32> to vector<8x128xbf16>
    %6 = tpu.iota {dimensions = array<i32: 1>} : vector<1x128xi32>
    %c32_i32 = arith.constant 32 : i32
    %7 = vector.broadcast %c32_i32 : i32 to vector<1x128xi32>
    %8 = arith.cmpi slt, %6, %7 : vector<1x128xi32>
    %9 = arith.extui %8 : vector<1x128xi1> to vector<1x128xi32>
    %10 = arith.sitofp %9 : vector<1x128xi32> to vector<1x128xf32>
    %c0_3 = arith.constant 0 : index
    %c0_4 = arith.constant 0 : index
    %c0_5 = arith.constant 0 : index
    %11 = vector.load %arg4[%c0_3, %c0_4, %c0_5] : memref<1x128x384xbf16, #tpu.memory_space<vmem>>, vector<1x128x384xbf16>
    %12 = vector.shape_cast %11 : vector<1x128x384xbf16> to vector<128x384xbf16>
    %cst = arith.constant dense<0.000000e+00> : vector<8x384xf32>
    %13 = tpu.matmul %5, %12, %cst {dimension_numbers = #tpu.dot_dimension_numbers<[1], [0], [0], [1], [0, 0, 1, 1], [], []>} : vector<8x128xbf16>, vector<128x384xbf16>, vector<8x384xf32> -> vector<8x384xf32>
    %c0_6 = arith.constant 0 : index
    %c0_7 = arith.constant 0 : index
    %c0_8 = arith.constant 0 : index
    %14 = vector.load %arg5[%c0_6, %c0_7, %c0_8] : memref<1x1x384xf32, #tpu.memory_space<vmem>>, vector<1x1x384xf32>
    %15 = vector.shape_cast %14 : vector<1x1x384xf32> to vector<1x384xf32>
    %16 = vector.broadcast %15 : vector<1x384xf32> to vector<8x384xf32>
    %17 = arith.addf %13, %16 : vector<8x384xf32>
    %18 = arith.truncf %17 : vector<8x384xf32> to vector<8x384xbf16>
    %19 = vector.extract_strided_slice %18 {offsets = [0, 0], sizes = [8, 128], strides = [1, 1]} : vector<8x384xbf16> to vector<8x128xbf16>
    %20 = vector.extract_strided_slice %18 {offsets = [0, 128], sizes = [8, 128], strides = [1, 1]} : vector<8x384xbf16> to vector<8x128xbf16>
    %21 = vector.extract_strided_slice %18 {offsets = [0, 256], sizes = [8, 128], strides = [1, 1]} : vector<8x384xbf16> to vector<8x128xbf16>
    %c0_9 = arith.constant 0 : index
    %c0_10 = arith.constant 0 : index
    %c0_11 = arith.constant 0 : index
    %22 = vector.load %arg3[%c0_9, %c0_10, %c0_11] : memref<1x1x8xf32, #tpu.memory_space<vmem>>, vector<1x1x8xf32>
    %23 = vector.shape_cast %22 : vector<1x1x8xf32> to vector<1x1x8xf32>
    %24 = vector.broadcast %23 : vector<1x1x8xf32> to vector<1x8x8xf32>
    %25 = vector.extract_strided_slice %19 {offsets = [0, 0], sizes = [8, 32], strides = [1, 1]} : vector<8x128xbf16> to vector<8x32xbf16>
    %26 = vector.shape_cast %25 : vector<8x32xbf16> to vector<1x8x32xbf16>
    %27 = vector.extract_strided_slice %20 {offsets = [0, 0], sizes = [8, 32], strides = [1, 1]} : vector<8x128xbf16> to vector<8x32xbf16>
    %28 = vector.shape_cast %27 : vector<8x32xbf16> to vector<1x8x32xbf16>
    %29 = vector.extract_strided_slice %21 {offsets = [0, 0], sizes = [8, 32], strides = [1, 1]} : vector<8x128xbf16> to vector<8x32xbf16>
    %30 = vector.shape_cast %29 : vector<8x32xbf16> to vector<1x8x32xbf16>
    "tpu.trace_start"() <{level = 10 : i32, message = "bqd,bkd->bqk"}> : () -> ()
    %cst_12 = arith.constant dense<0.000000e+00> : vector<1x8x8xf32>
    %31 = tpu.matmul %26, %28, %cst_12 {dimension_numbers = #tpu.dot_dimension_numbers<[2], [2], [1], [1], [0, 0, 0, 1, 1, 1], [0], [0]>} : vector<1x8x32xbf16>, vector<1x8x32xbf16>, vector<1x8x8xf32> -> vector<1x8x8xf32>
    "tpu.trace_stop"() : () -> ()
    %32 = arith.addf %31, %24 : vector<1x8x8xf32>
    %cst_13 = arith.constant dense<0xFF800000> : vector<1x8xf32>
    %33 = vector.multi_reduction <maximumf>, %32, %cst_13 [2] : vector<1x8x8xf32> to vector<1x8xf32>
    %34 = vector.shape_cast %33 : vector<1x8xf32> to vector<1x8x1xf32>
    %35 = vector.broadcast %34 : vector<1x8x1xf32> to vector<1x8x8xf32>
    %36 = arith.subf %32, %35 : vector<1x8x8xf32>
    %37 = math.exp %36 : vector<1x8x8xf32>
    %cst_14 = arith.constant dense<0.000000e+00> : vector<1x8xf32>
    %38 = vector.multi_reduction <add>, %37, %cst_14 [2] : vector<1x8x8xf32> to vector<1x8xf32>
    %39 = vector.shape_cast %38 : vector<1x8xf32> to vector<1x8x1xf32>
    %40 = tpu.reciprocal %39 {approx = true} : vector<1x8x1xf32> -> vector<1x8x1xf32>
    %41 = vector.broadcast %40 : vector<1x8x1xf32> to vector<1x8x8xf32>
    %42 = arith.mulf %37, %41 : vector<1x8x8xf32>
    %43 = arith.truncf %42 : vector<1x8x8xf32> to vector<1x8x8xbf16>
    "tpu.trace_start"() <{level = 10 : i32, message = "bqk,bkd->bqd"}> : () -> ()
    %cst_15 = arith.constant dense<0.000000e+00> : vector<1x8x32xf32>
    %44 = tpu.matmul %43, %30, %cst_15 {dimension_numbers = #tpu.dot_dimension_numbers<[2], [1], [1], [2], [0, 0, 0, 1, 1, 2], [0], [0]>} : vector<1x8x8xbf16>, vector<1x8x32xbf16>, vector<1x8x32xf32> -> vector<1x8x32xf32>
    "tpu.trace_stop"() : () -> ()
    %45 = vector.shape_cast %44 : vector<1x8x32xf32> to vector<8x32xf32>
    %46 = vector.extract_strided_slice %19 {offsets = [0, 32], sizes = [8, 32], strides = [1, 1]} : vector<8x128xbf16> to vector<8x32xbf16>
    %47 = vector.shape_cast %46 : vector<8x32xbf16> to vector<1x8x32xbf16>
    %48 = vector.extract_strided_slice %20 {offsets = [0, 32], sizes = [8, 32], strides = [1, 1]} : vector<8x128xbf16> to vector<8x32xbf16>
    %49 = vector.shape_cast %48 : vector<8x32xbf16> to vector<1x8x32xbf16>
    %50 = vector.extract_strided_slice %21 {offsets = [0, 32], sizes = [8, 32], strides = [1, 1]} : vector<8x128xbf16> to vector<8x32xbf16>
    %51 = vector.shape_cast %50 : vector<8x32xbf16> to vector<1x8x32xbf16>
    "tpu.trace_start"() <{level = 10 : i32, message = "bqd,bkd->bqk"}> : () -> ()
    %cst_16 = arith.constant dense<0.000000e+00> : vector<1x8x8xf32>
    %52 = tpu.matmul %47, %49, %cst_16 {dimension_numbers = #tpu.dot_dimension_numbers<[2], [2], [1], [1], [0, 0, 0, 1, 1, 1], [0], [0]>} : vector<1x8x32xbf16>, vector<1x8x32xbf16>, vector<1x8x8xf32> -> vector<1x8x8xf32>
    "tpu.trace_stop"() : () -> ()
    %53 = arith.addf %52, %24 : vector<1x8x8xf32>
    %cst_17 = arith.constant dense<0xFF800000> : vector<1x8xf32>
    %54 = vector.multi_reduction <maximumf>, %53, %cst_17 [2] : vector<1x8x8xf32> to vector<1x8xf32>
    %55 = vector.shape_cast %54 : vector<1x8xf32> to vector<1x8x1xf32>
    %56 = vector.broadcast %55 : vector<1x8x1xf32> to vector<1x8x8xf32>
    %57 = arith.subf %53, %56 : vector<1x8x8xf32>
    %58 = math.exp %57 : vector<1x8x8xf32>
    %cst_18 = arith.constant dense<0.000000e+00> : vector<1x8xf32>
    %59 = vector.multi_reduction <add>, %58, %cst_18 [2] : vector<1x8x8xf32> to vector<1x8xf32>
    %60 = vector.shape_cast %59 : vector<1x8xf32> to vector<1x8x1xf32>
    %61 = tpu.reciprocal %60 {approx = true} : vector<1x8x1xf32> -> vector<1x8x1xf32>
    %62 = vector.broadcast %61 : vector<1x8x1xf32> to vector<1x8x8xf32>
    %63 = arith.mulf %58, %62 : vector<1x8x8xf32>
    %64 = arith.truncf %63 : vector<1x8x8xf32> to vector<1x8x8xbf16>
    "tpu.trace_start"() <{level = 10 : i32, message = "bqk,bkd->bqd"}> : () -> ()
    %cst_19 = arith.constant dense<0.000000e+00> : vector<1x8x32xf32>
    %65 = tpu.matmul %64, %51, %cst_19 {dimension_numbers = #tpu.dot_dimension_numbers<[2], [1], [1], [2], [0, 0, 0, 1, 1, 2], [0], [0]>} : vector<1x8x8xbf16>, vector<1x8x32xbf16>, vector<1x8x32xf32> -> vector<1x8x32xf32>
    "tpu.trace_stop"() : () -> ()
    %66 = vector.shape_cast %65 : vector<1x8x32xf32> to vector<8x32xf32>
    %67 = vector.extract_strided_slice %19 {offsets = [0, 64], sizes = [8, 32], strides = [1, 1]} : vector<8x128xbf16> to vector<8x32xbf16>
    %68 = vector.shape_cast %67 : vector<8x32xbf16> to vector<1x8x32xbf16>
    %69 = vector.extract_strided_slice %20 {offsets = [0, 64], sizes = [8, 32], strides = [1, 1]} : vector<8x128xbf16> to vector<8x32xbf16>
    %70 = vector.shape_cast %69 : vector<8x32xbf16> to vector<1x8x32xbf16>
    %71 = vector.extract_strided_slice %21 {offsets = [0, 64], sizes = [8, 32], strides = [1, 1]} : vector<8x128xbf16> to vector<8x32xbf16>
    %72 = vector.shape_cast %71 : vector<8x32xbf16> to vector<1x8x32xbf16>
    "tpu.trace_start"() <{level = 10 : i32, message = "bqd,bkd->bqk"}> : () -> ()
    %cst_20 = arith.constant dense<0.000000e+00> : vector<1x8x8xf32>
    %73 = tpu.matmul %68, %70, %cst_20 {dimension_numbers = #tpu.dot_dimension_numbers<[2], [2], [1], [1], [0, 0, 0, 1, 1, 1], [0], [0]>} : vector<1x8x32xbf16>, vector<1x8x32xbf16>, vector<1x8x8xf32> -> vector<1x8x8xf32>
    "tpu.trace_stop"() : () -> ()
    %74 = arith.addf %73, %24 : vector<1x8x8xf32>
    %cst_21 = arith.constant dense<0xFF800000> : vector<1x8xf32>
    %75 = vector.multi_reduction <maximumf>, %74, %cst_21 [2] : vector<1x8x8xf32> to vector<1x8xf32>
    %76 = vector.shape_cast %75 : vector<1x8xf32> to vector<1x8x1xf32>
    %77 = vector.broadcast %76 : vector<1x8x1xf32> to vector<1x8x8xf32>
    %78 = arith.subf %74, %77 : vector<1x8x8xf32>
    %79 = math.exp %78 : vector<1x8x8xf32>
    %cst_22 = arith.constant dense<0.000000e+00> : vector<1x8xf32>
    %80 = vector.multi_reduction <add>, %79, %cst_22 [2] : vector<1x8x8xf32> to vector<1x8xf32>
    %81 = vector.shape_cast %80 : vector<1x8xf32> to vector<1x8x1xf32>
    %82 = tpu.reciprocal %81 {approx = true} : vector<1x8x1xf32> -> vector<1x8x1xf32>
    %83 = vector.broadcast %82 : vector<1x8x1xf32> to vector<1x8x8xf32>
    %84 = arith.mulf %79, %83 : vector<1x8x8xf32>
    %85 = arith.truncf %84 : vector<1x8x8xf32> to vector<1x8x8xbf16>
    "tpu.trace_start"() <{level = 10 : i32, message = "bqk,bkd->bqd"}> : () -> ()
    %cst_23 = arith.constant dense<0.000000e+00> : vector<1x8x32xf32>
    %86 = tpu.matmul %85, %72, %cst_23 {dimension_numbers = #tpu.dot_dimension_numbers<[2], [1], [1], [2], [0, 0, 0, 1, 1, 2], [0], [0]>} : vector<1x8x8xbf16>, vector<1x8x32xbf16>, vector<1x8x32xf32> -> vector<1x8x32xf32>
    "tpu.trace_stop"() : () -> ()
    %87 = vector.shape_cast %86 : vector<1x8x32xf32> to vector<8x32xf32>
    %88 = vector.extract_strided_slice %19 {offsets = [0, 96], sizes = [8, 32], strides = [1, 1]} : vector<8x128xbf16> to vector<8x32xbf16>
    %89 = vector.shape_cast %88 : vector<8x32xbf16> to vector<1x8x32xbf16>
    %90 = vector.extract_strided_slice %20 {offsets = [0, 96], sizes = [8, 32], strides = [1, 1]} : vector<8x128xbf16> to vector<8x32xbf16>
    %91 = vector.shape_cast %90 : vector<8x32xbf16> to vector<1x8x32xbf16>
    %92 = vector.extract_strided_slice %21 {offsets = [0, 96], sizes = [8, 32], strides = [1, 1]} : vector<8x128xbf16> to vector<8x32xbf16>
    %93 = vector.shape_cast %92 : vector<8x32xbf16> to vector<1x8x32xbf16>
    "tpu.trace_start"() <{level = 10 : i32, message = "bqd,bkd->bqk"}> : () -> ()
    %cst_24 = arith.constant dense<0.000000e+00> : vector<1x8x8xf32>
    %94 = tpu.matmul %89, %91, %cst_24 {dimension_numbers = #tpu.dot_dimension_numbers<[2], [2], [1], [1], [0, 0, 0, 1, 1, 1], [0], [0]>} : vector<1x8x32xbf16>, vector<1x8x32xbf16>, vector<1x8x8xf32> -> vector<1x8x8xf32>
    "tpu.trace_stop"() : () -> ()
    %95 = arith.addf %94, %24 : vector<1x8x8xf32>
    %cst_25 = arith.constant dense<0xFF800000> : vector<1x8xf32>
    %96 = vector.multi_reduction <maximumf>, %95, %cst_25 [2] : vector<1x8x8xf32> to vector<1x8xf32>
    %97 = vector.shape_cast %96 : vector<1x8xf32> to vector<1x8x1xf32>
    %98 = vector.broadcast %97 : vector<1x8x1xf32> to vector<1x8x8xf32>
    %99 = arith.subf %95, %98 : vector<1x8x8xf32>
    %100 = math.exp %99 : vector<1x8x8xf32>
    %cst_26 = arith.constant dense<0.000000e+00> : vector<1x8xf32>
    %101 = vector.multi_reduction <add>, %100, %cst_26 [2] : vector<1x8x8xf32> to vector<1x8xf32>
    %102 = vector.shape_cast %101 : vector<1x8xf32> to vector<1x8x1xf32>
    %103 = tpu.reciprocal %102 {approx = true} : vector<1x8x1xf32> -> vector<1x8x1xf32>
    %104 = vector.broadcast %103 : vector<1x8x1xf32> to vector<1x8x8xf32>
    %105 = arith.mulf %100, %104 : vector<1x8x8xf32>
    %106 = arith.truncf %105 : vector<1x8x8xf32> to vector<1x8x8xbf16>
    "tpu.trace_start"() <{level = 10 : i32, message = "bqk,bkd->bqd"}> : () -> ()
    %cst_27 = arith.constant dense<0.000000e+00> : vector<1x8x32xf32>
    %107 = tpu.matmul %106, %93, %cst_27 {dimension_numbers = #tpu.dot_dimension_numbers<[2], [1], [1], [2], [0, 0, 0, 1, 1, 2], [0], [0]>} : vector<1x8x8xbf16>, vector<1x8x32xbf16>, vector<1x8x32xf32> -> vector<1x8x32xf32>
    "tpu.trace_stop"() : () -> ()
    %108 = vector.shape_cast %107 : vector<1x8x32xf32> to vector<8x32xf32>
    %109 = tpu.concatenate %45, %66, %87, %108 in 1 : vector<8x32xf32>, vector<8x32xf32>, vector<8x32xf32>, vector<8x32xf32> -> vector<8x128xf32>
    %110 = arith.truncf %109 : vector<8x128xf32> to vector<8x128xbf16>
    %c0_28 = arith.constant 0 : index
    %c0_29 = arith.constant 0 : index
    %c0_30 = arith.constant 0 : index
    %111 = vector.load %arg6[%c0_28, %c0_29, %c0_30] : memref<1x128x128xbf16, #tpu.memory_space<vmem>>, vector<1x128x128xbf16>
    %112 = vector.shape_cast %111 : vector<1x128x128xbf16> to vector<128x128xbf16>
    %cst_31 = arith.constant dense<0.000000e+00> : vector<8x128xf32>
    %113 = tpu.matmul %110, %112, %cst_31 {dimension_numbers = #tpu.dot_dimension_numbers<[1], [0], [0], [1], [0, 0, 1, 1], [], []>} : vector<8x128xbf16>, vector<128x128xbf16>, vector<8x128xf32> -> vector<8x128xf32>
    %c0_32 = arith.constant 0 : index
    %c0_33 = arith.constant 0 : index
    %c0_34 = arith.constant 0 : index
    %114 = vector.load %arg7[%c0_32, %c0_33, %c0_34] : memref<1x1x128xf32, #tpu.memory_space<vmem>>, vector<1x1x128xf32>
    %115 = vector.shape_cast %114 : vector<1x1x128xf32> to vector<1x128xf32>
    %116 = vector.broadcast %115 : vector<1x128xf32> to vector<8x128xf32>
    %117 = arith.addf %113, %116 : vector<8x128xf32>
    %118 = arith.addf %4, %117 : vector<8x128xf32>
    %c0_35 = arith.constant 0 : index
    %c0_36 = arith.constant 0 : index
    %c0_37 = arith.constant 0 : index
    %119 = vector.load %arg8[%c0_35, %c0_36, %c0_37] : memref<1x1x128xf32, #tpu.memory_space<vmem>>, vector<1x1x128xf32>
    %120 = vector.shape_cast %119 : vector<1x1x128xf32> to vector<1x128xf32>
    %c0_38 = arith.constant 0 : index
    %c0_39 = arith.constant 0 : index
    %c0_40 = arith.constant 0 : index
    %121 = vector.load %arg9[%c0_38, %c0_39, %c0_40] : memref<1x1x128xf32, #tpu.memory_space<vmem>>, vector<1x1x128xf32>
    %122 = vector.shape_cast %121 : vector<1x1x128xf32> to vector<1x128xf32>
    %cst_41 = arith.constant dense<0.000000e+00> : vector<8xf32>
    %123 = vector.multi_reduction <add>, %118, %cst_41 [1] : vector<8x128xf32> to vector<8xf32>
    %124 = vector.shape_cast %123 : vector<8xf32> to vector<8x1xf32>
    %cst_42 = arith.constant 3.125000e-02 : f32
    %125 = vector.broadcast %cst_42 : f32 to vector<8x1xf32>
    %126 = arith.mulf %124, %125 : vector<8x1xf32>
    %127 = vector.broadcast %126 : vector<8x1xf32> to vector<8x128xf32>
    %128 = arith.subf %118, %127 : vector<8x128xf32>
    %129 = vector.broadcast %10 : vector<1x128xf32> to vector<8x128xf32>
    %130 = arith.mulf %128, %129 : vector<8x128xf32>
    %131 = arith.mulf %130, %130 : vector<8x128xf32>
    %cst_43 = arith.constant dense<0.000000e+00> : vector<8xf32>
    %132 = vector.multi_reduction <add>, %131, %cst_43 [1] : vector<8x128xf32> to vector<8xf32>
    %133 = vector.shape_cast %132 : vector<8xf32> to vector<8x1xf32>
    %cst_44 = arith.constant 3.125000e-02 : f32
    %134 = vector.broadcast %cst_44 : f32 to vector<8x1xf32>
    %135 = arith.mulf %133, %134 : vector<8x1xf32>
    %cst_45 = arith.constant 9.99999974E-6 : f32
    %136 = vector.broadcast %cst_45 : f32 to vector<8x1xf32>
    %137 = arith.addf %135, %136 : vector<8x1xf32>
    %138 = math.rsqrt %137 : vector<8x1xf32>
    %139 = vector.broadcast %138 : vector<8x1xf32> to vector<8x128xf32>
    %140 = arith.mulf %130, %139 : vector<8x128xf32>
    %141 = vector.broadcast %120 : vector<1x128xf32> to vector<8x128xf32>
    %142 = arith.mulf %140, %141 : vector<8x128xf32>
    %143 = vector.broadcast %122 : vector<1x128xf32> to vector<8x128xf32>
    %144 = arith.addf %142, %143 : vector<8x128xf32>
    %145 = arith.truncf %144 : vector<8x128xf32> to vector<8x128xbf16>
    %c0_46 = arith.constant 0 : index
    %c0_47 = arith.constant 0 : index
    %c0_48 = arith.constant 0 : index
    %146 = vector.load %arg10[%c0_46, %c0_47, %c0_48] : memref<1x128x128xbf16, #tpu.memory_space<vmem>>, vector<1x128x128xbf16>
    %147 = vector.shape_cast %146 : vector<1x128x128xbf16> to vector<128x128xbf16>
    %cst_49 = arith.constant dense<0.000000e+00> : vector<8x128xf32>
    %148 = tpu.matmul %145, %147, %cst_49 {dimension_numbers = #tpu.dot_dimension_numbers<[1], [0], [0], [1], [0, 0, 1, 1], [], []>} : vector<8x128xbf16>, vector<128x128xbf16>, vector<8x128xf32> -> vector<8x128xf32>
    %c0_50 = arith.constant 0 : index
    %c0_51 = arith.constant 0 : index
    %c0_52 = arith.constant 0 : index
    %149 = vector.load %arg11[%c0_50, %c0_51, %c0_52] : memref<1x1x128xf32, #tpu.memory_space<vmem>>, vector<1x1x128xf32>
    %150 = vector.shape_cast %149 : vector<1x1x128xf32> to vector<1x128xf32>
    %151 = vector.broadcast %150 : vector<1x128xf32> to vector<8x128xf32>
    %152 = arith.addf %148, %151 : vector<8x128xf32>
    %cst_53 = arith.constant 0.000000e+00 : f32
    %153 = vector.broadcast %cst_53 : f32 to vector<8x128xf32>
    %154 = arith.maximumf %152, %153 : vector<8x128xf32>
    %155 = arith.truncf %154 : vector<8x128xf32> to vector<8x128xbf16>
    %c0_54 = arith.constant 0 : index
    %c0_55 = arith.constant 0 : index
    %c0_56 = arith.constant 0 : index
    %156 = vector.load %arg12[%c0_54, %c0_55, %c0_56] : memref<1x128x128xbf16, #tpu.memory_space<vmem>>, vector<1x128x128xbf16>
    %157 = vector.shape_cast %156 : vector<1x128x128xbf16> to vector<128x128xbf16>
    %cst_57 = arith.constant dense<0.000000e+00> : vector<8x128xf32>
    %158 = tpu.matmul %155, %157, %cst_57 {dimension_numbers = #tpu.dot_dimension_numbers<[1], [0], [0], [1], [0, 0, 1, 1], [], []>} : vector<8x128xbf16>, vector<128x128xbf16>, vector<8x128xf32> -> vector<8x128xf32>
    %c0_58 = arith.constant 0 : index
    %c0_59 = arith.constant 0 : index
    %c0_60 = arith.constant 0 : index
    %159 = vector.load %arg13[%c0_58, %c0_59, %c0_60] : memref<1x1x128xf32, #tpu.memory_space<vmem>>, vector<1x1x128xf32>
    %160 = vector.shape_cast %159 : vector<1x1x128xf32> to vector<1x128xf32>
    %161 = vector.broadcast %160 : vector<1x128xf32> to vector<8x128xf32>
    %162 = arith.addf %158, %161 : vector<8x128xf32>
    %163 = arith.addf %144, %162 : vector<8x128xf32>
    %c0_61 = arith.constant 0 : index
    %c0_62 = arith.constant 0 : index
    %c0_63 = arith.constant 0 : index
    %164 = vector.load %arg14[%c0_61, %c0_62, %c0_63] : memref<1x1x128xf32, #tpu.memory_space<vmem>>, vector<1x1x128xf32>
    %165 = vector.shape_cast %164 : vector<1x1x128xf32> to vector<1x128xf32>
    %c0_64 = arith.constant 0 : index
    %c0_65 = arith.constant 0 : index
    %c0_66 = arith.constant 0 : index
    %166 = vector.load %arg15[%c0_64, %c0_65, %c0_66] : memref<1x1x128xf32, #tpu.memory_space<vmem>>, vector<1x1x128xf32>
    %167 = vector.shape_cast %166 : vector<1x1x128xf32> to vector<1x128xf32>
    %cst_67 = arith.constant dense<0.000000e+00> : vector<8xf32>
    %168 = vector.multi_reduction <add>, %163, %cst_67 [1] : vector<8x128xf32> to vector<8xf32>
    %169 = vector.shape_cast %168 : vector<8xf32> to vector<8x1xf32>
    %cst_68 = arith.constant 3.125000e-02 : f32
    %170 = vector.broadcast %cst_68 : f32 to vector<8x1xf32>
    %171 = arith.mulf %169, %170 : vector<8x1xf32>
    %172 = vector.broadcast %171 : vector<8x1xf32> to vector<8x128xf32>
    %173 = arith.subf %163, %172 : vector<8x128xf32>
    %174 = vector.broadcast %10 : vector<1x128xf32> to vector<8x128xf32>
    %175 = arith.mulf %173, %174 : vector<8x128xf32>
    %176 = arith.mulf %175, %175 : vector<8x128xf32>
    %cst_69 = arith.constant dense<0.000000e+00> : vector<8xf32>
    %177 = vector.multi_reduction <add>, %176, %cst_69 [1] : vector<8x128xf32> to vector<8xf32>
    %178 = vector.shape_cast %177 : vector<8xf32> to vector<8x1xf32>
    %cst_70 = arith.constant 3.125000e-02 : f32
    %179 = vector.broadcast %cst_70 : f32 to vector<8x1xf32>
    %180 = arith.mulf %178, %179 : vector<8x1xf32>
    %cst_71 = arith.constant 9.99999974E-6 : f32
    %181 = vector.broadcast %cst_71 : f32 to vector<8x1xf32>
    %182 = arith.addf %180, %181 : vector<8x1xf32>
    %183 = math.rsqrt %182 : vector<8x1xf32>
    %184 = vector.broadcast %183 : vector<8x1xf32> to vector<8x128xf32>
    %185 = arith.mulf %175, %184 : vector<8x128xf32>
    %186 = vector.broadcast %165 : vector<1x128xf32> to vector<8x128xf32>
    %187 = arith.mulf %185, %186 : vector<8x128xf32>
    %188 = vector.broadcast %167 : vector<1x128xf32> to vector<8x128xf32>
    %189 = arith.addf %187, %188 : vector<8x128xf32>
    %190 = vector.shape_cast %189 : vector<8x128xf32> to vector<1x8x128xf32>
    %c0_72 = arith.constant 0 : index
    %c0_73 = arith.constant 0 : index
    %c0_74 = arith.constant 0 : index
    %191 = vector.load %arg17[%c0_72, %c0_73, %c0_74] : memref<1x8x128xf32, #tpu.memory_space<vmem>>, vector<1x8x128xf32>
    tpu.vector_store %arg17[%c0_72, %c0_73, %c0_74], %190 {strides = array<i32>} : memref<1x8x128xf32, #tpu.memory_space<vmem>>, vector<1x8x128xf32>,
    %c1_i32 = arith.constant 1 : i32
    %192 = arith.cmpi eq, %arg1, %c1_i32 : i32
    %193 = arith.extui %192 : i1 to i32
    %c0_i32_75 = arith.constant 0 : i32
    %194 = arith.cmpi ne, %193, %c0_i32_75 : i32
    scf.if %194 {
      %c0_76 = arith.constant 0 : index
      %c0_77 = arith.constant 0 : index
      %c0_78 = arith.constant 0 : index
      %195 = vector.load %arg2[%c0_76, %c0_77, %c0_78] : memref<1x8x128xf32, #tpu.memory_space<vmem>>, vector<1x8x128xf32>
      %c0_79 = arith.constant 0 : index
      %c0_80 = arith.constant 0 : index
      %c0_81 = arith.constant 0 : index
      %196 = vector.load %arg17[%c0_79, %c0_80, %c0_81] : memref<1x8x128xf32, #tpu.memory_space<vmem>>, vector<1x8x128xf32>
      %197 = arith.addf %195, %196 : vector<1x8x128xf32>
      %c0_82 = arith.constant 0 : index
      %c0_83 = arith.constant 0 : index
      %c0_84 = arith.constant 0 : index
      %198 = vector.load %arg16[%c0_82, %c0_83, %c0_84] : memref<1x8x128xf32, #tpu.memory_space<vmem>>, vector<1x8x128xf32>
      tpu.vector_store %arg16[%c0_82, %c0_83, %c0_84], %197 {strides = array<i32>} : memref<1x8x128xf32, #tpu.memory_space<vmem>>, vector<1x8x128xf32>,
    } else {
    }
    return
  }
  func.func @transform_0(%arg0: i32, %arg1: i32) -> (i32, i32, i32) {
    %c0_i32 = arith.constant 0 : i32
    %c0_i32_0 = arith.constant 0 : i32
    %c0_i32_1 = arith.constant 0 : i32
    return %arg0, %c0_i32, %c0_i32_0 : i32, i32, i32
  }
  func.func @transform_1(%arg0: i32, %arg1: i32) -> (i32, i32, i32) {
    %c0_i32 = arith.constant 0 : i32
    %c0_i32_0 = arith.constant 0 : i32
    %c0_i32_1 = arith.constant 0 : i32
    return %arg0, %c0_i32, %c0_i32_0 : i32, i32, i32
  }
  func.func @transform_2(%arg0: i32, %arg1: i32) -> (i32, i32, i32) {
    %c0_i32 = arith.constant 0 : i32
    %c0_i32_0 = arith.constant 0 : i32
    %c0_i32_1 = arith.constant 0 : i32
    return %arg1, %c0_i32, %c0_i32_0 : i32, i32, i32
  }
  func.func @transform_3(%arg0: i32, %arg1: i32) -> (i32, i32, i32) {
    %c0_i32 = arith.constant 0 : i32
    %c0_i32_0 = arith.constant 0 : i32
    %c0_i32_1 = arith.constant 0 : i32
    return %arg1, %c0_i32, %c0_i32_0 : i32, i32, i32
  }
  func.func @transform_4(%arg0: i32, %arg1: i32) -> (i32, i32, i32) {
    %c0_i32 = arith.constant 0 : i32
    %c0_i32_0 = arith.constant 0 : i32
    %c0_i32_1 = arith.constant 0 : i32
    return %arg1, %c0_i32, %c0_i32_0 : i32, i32, i32
  }
  func.func @transform_5(%arg0: i32, %arg1: i32) -> (i32, i32, i32) {
    %c0_i32 = arith.constant 0 : i32
    %c0_i32_0 = arith.constant 0 : i32
    %c0_i32_1 = arith.constant 0 : i32
    return %arg1, %c0_i32, %c0_i32_0 : i32, i32, i32
  }
  func.func @transform_6(%arg0: i32, %arg1: i32) -> (i32, i32, i32) {
    %c0_i32 = arith.constant 0 : i32
    %c0_i32_0 = arith.constant 0 : i32
    %c0_i32_1 = arith.constant 0 : i32
    return %arg1, %c0_i32, %c0_i32_0 : i32, i32, i32
  }
  func.func @transform_7(%arg0: i32, %arg1: i32) -> (i32, i32, i32) {
    %c0_i32 = arith.constant 0 : i32
    %c0_i32_0 = arith.constant 0 : i32
    %c0_i32_1 = arith.constant 0 : i32
    return %arg1, %c0_i32, %c0_i32_0 : i32, i32, i32
  }
  func.func @transform_8(%arg0: i32, %arg1: i32) -> (i32, i32, i32) {
    %c0_i32 = arith.constant 0 : i32
    %c0_i32_0 = arith.constant 0 : i32
    %c0_i32_1 = arith.constant 0 : i32
    return %arg1, %c0_i32, %c0_i32_0 : i32, i32, i32
  }
  func.func @transform_9(%arg0: i32, %arg1: i32) -> (i32, i32, i32) {
    %c0_i32 = arith.constant 0 : i32
    %c0_i32_0 = arith.constant 0 : i32
    %c0_i32_1 = arith.constant 0 : i32
    return %arg1, %c0_i32, %c0_i32_0 : i32, i32, i32
  }
  func.func @transform_10(%arg0: i32, %arg1: i32) -> (i32, i32, i32) {
    %c0_i32 = arith.constant 0 : i32
    %c0_i32_0 = arith.constant 0 : i32
    %c0_i32_1 = arith.constant 0 : i32
    return %arg1, %c0_i32, %c0_i32_0 : i32, i32, i32
  }
  func.func @transform_11(%arg0: i32, %arg1: i32) -> (i32, i32, i32) {
    %c0_i32 = arith.constant 0 : i32
    %c0_i32_0 = arith.constant 0 : i32
    %c0_i32_1 = arith.constant 0 : i32
    return %arg1, %c0_i32, %c0_i32_0 : i32, i32, i32
  }
  func.func @transform_12(%arg0: i32, %arg1: i32) -> (i32, i32, i32) {
    %c0_i32 = arith.constant 0 : i32
    %c0_i32_0 = arith.constant 0 : i32
    %c0_i32_1 = arith.constant 0 : i32
    return %arg1, %c0_i32, %c0_i32_0 : i32, i32, i32
  }
  func.func @transform_13(%arg0: i32, %arg1: i32) -> (i32, i32, i32) {
    %c0_i32 = arith.constant 0 : i32
    %c0_i32_0 = arith.constant 0 : i32
    %c0_i32_1 = arith.constant 0 : i32
    return %arg1, %c0_i32, %c0_i32_0 : i32, i32, i32
  }
  func.func @transform_14(%arg0: i32, %arg1: i32) -> (i32, i32, i32) {
    %c0_i32 = arith.constant 0 : i32
    %c0_i32_0 = arith.constant 0 : i32
    %c0_i32_1 = arith.constant 0 : i32
    return %arg0, %c0_i32, %c0_i32_0 : i32, i32, i32
  }
}

</mosaic_0001>

<llo_original>
// kernel: tpu_custom_call.1
$region0: #{tpu_custom_call.1}
  #allocation0 [shape = 'u32[]', space=smem, size = 0x4, offset = 0x4, fixed_abs, tag = 'smem constant byte address 0x4 - core index']
  #allocation1 [shape = 'u32[144,128]{1,0:T(1,128)}', space=vmem, size = 0x12000, scoped, tag = 'internal scratch']
  #allocation2 [shape = 'f32[1,8,128]{2,1,0:T(8,128)}', space=vmem, size = 0x1000, scoped, tag = 'scratch operand']
  %s0 = inlined_call_operand.hbm [shape: f32[2,8,128], index: 0, kind: input, shape index: {}]
  %s1 = inlined_call_operand.vmem [shape: f32[2,1,8], index: 1, kind: input, shape index: {}]
  %s2 = inlined_call_operand.hbm [shape: bf16[2,128,384], index: 2, kind: input, shape index: {}]
  %s3 = inlined_call_operand.vmem [shape: f32[2,1,384], index: 3, kind: input, shape index: {}]
  %s4 = inlined_call_operand.hbm [shape: bf16[2,128,128], index: 4, kind: input, shape index: {}]
  %s5 = inlined_call_operand.vmem [shape: f32[2,1,128], index: 5, kind: input, shape index: {}]
  %s6 = inlined_call_operand.vmem [shape: f32[2,1,128], index: 6, kind: input, shape index: {}]
  %s7 = inlined_call_operand.vmem [shape: f32[2,1,128], index: 7, kind: input, shape index: {}]
  %s8 = inlined_call_operand.hbm [shape: bf16[2,128,128], index: 8, kind: input, shape index: {}]
  %s9 = inlined_call_operand.vmem [shape: f32[2,1,128], index: 9, kind: input, shape index: {}]
  %s10 = inlined_call_operand.hbm [shape: bf16[2,128,128], index: 10, kind: input, shape index: {}]
  %s11 = inlined_call_operand.vmem [shape: f32[2,1,128], index: 11, kind: input, shape index: {}]
  %s12 = inlined_call_operand.vmem [shape: f32[2,1,128], index: 12, kind: input, shape index: {}]
  %s13 = inlined_call_operand.vmem [shape: f32[2,1,128], index: 13, kind: input, shape index: {}]
  %s14 = inlined_call_operand.hbm [shape: f32[2,8,128], index: 14, kind: output, shape index: {}]
  %s15 = sld [smem:[#allocation0]]
  $region117: #{tpu_custom_call.1} parent=0
    _
  %s17 = ssub.s32 1, %s15
  %s18 = scalar_select 0, %s17, %s15
  $region1: #{tpu_custom_call.1} parent=0
    #allocation3 [shape = 'u8[8192]{0}', space=vmem, size = 0x2000, scoped, tag = 'input window, operand 0']
    #allocation4 [shape = 's32[2]{0}', space=sflag, size = 0x8, scoped, tag = 'scoped memory for tpu_custom_call.1']
    #allocation5 [shape = 's32[2]{0}', space=sflag, size = 0x8, scoped, tag = 'scoped memory for tpu_custom_call.1']
    #allocation6 [shape = 'u8[196608]{0}', space=vmem, size = 0x30000, scoped, tag = 'input window, operand 2']
    #allocation7 [shape = 's32[2]{0}', space=sflag, size = 0x8, scoped, tag = 'scoped memory for tpu_custom_call.1']
    #allocation8 [shape = 'u8[65536]{0}', space=vmem, size = 0x10000, scoped, tag = 'input window, operand 4']
    #allocation9 [shape = 'u8[65536]{0}', space=vmem, size = 0x10000, scoped, tag = 'input window, operand 8']
    #allocation10 [shape = 's32[2]{0}', space=sflag, size = 0x8, scoped, tag = 'scoped memory for tpu_custom_call.1']
    #allocation11 [shape = 'u8[65536]{0}', space=vmem, size = 0x10000, scoped, tag = 'input window, operand 10']
    #allocation12 [shape = 'u8[8192]{0}', space=vmem, size = 0x2000, scoped, tag = 'output window, operand 0']
    %19 = vsyncpa [#allocation4], 0
    %s20 = scalar_lea.sflag [#allocation4], 1
    %21 = vsyncpa %s20, 0
    %22 = vsyncpa [#allocation7], 0
    %s23 = scalar_lea.sflag [#allocation7], 1
    %24 = vsyncpa %s23, 0
    %25 = vsyncpa [#allocation10], 0
    %s26 = scalar_lea.sflag [#allocation10], 1
    %27 = vsyncpa %s26, 0
    %28 = vsyncpa [#allocation5], 0
    %s29 = scalar_lea.sflag [#allocation5], 1
    %30 = vsyncpa %s29, 0
    loop: start=0, step=1, limit=6
    $region2: #{tpu_custom_call.1} parent=1 // loop_pre_header
      _
    $region3: #{tpu_custom_call.1} parent=1 // loop_header
      %s32 = sphi 0, %s36
      %p33 = scmp.ge.s32.totalorder %s32, 6
      %s39 = sphi 0, %s51
      %s40 = sphi 0, %s47
      %s41 = sphi 0, %s39
      %s42 = sphi 0, %s40
      %s43 = sphi 0, %s41
      %s44 = sphi 0, %s42
      %s54 = sphi 0, %s56
      %s57 = sphi 0, %s54
      %s58 = sphi 0, %s57
      %s74 = sphi 0, %s58
      %s80 = sphi 0, %s82
      %s83 = sphi 0, %s80
      %s84 = sphi 0, %s83
      %s100 = sphi 0, %s84
      %s106 = sphi 0, %s108
      %s109 = sphi 0, %s106
      %s110 = sphi 0, %s109
      %s126 = sphi 0, %s110
      %s132 = sphi 0, %s134
      %s135 = sphi 0, %s132
      %s136 = sphi 0, %s135
      %s152 = sphi 0, %s136
      %s158 = sphi 0, %s160
      %s161 = sphi 0, %s158
      %s162 = sphi 0, %s161
      %s178 = sphi 0, %s162
      %s184 = sphi 0, %s186
      %s187 = sphi 0, %s184
      %s188 = sphi 0, %s187
      %s204 = sphi 0, %s188
      %s210 = sphi 0, %s212
      %s213 = sphi 0, %s210
      %s214 = sphi 0, %s213
      %s230 = sphi 0, %s214
      %s236 = sphi 0, %s238
      %s239 = sphi 0, %s236
      %s240 = sphi 0, %s239
      %s256 = sphi 0, %s240
      %s262 = sphi 0, %s264
      %s265 = sphi 0, %s262
      %s266 = sphi 0, %s265
      %s282 = sphi 0, %s266
      %s288 = sphi 0, %s290
      %s291 = sphi 0, %s288
      %s292 = sphi 0, %s291
      %s308 = sphi 0, %s292
      %s314 = sphi 0, %s316
      %s317 = sphi 0, %s314
      %s318 = sphi 0, %s317
      %s334 = sphi 0, %s318
      %s340 = sphi 0, %s342
      %s343 = sphi 0, %s340
      %s344 = sphi 0, %s343
      %s360 = sphi 0, %s344
      %s366 = sphi 0, %s368
      %s369 = sphi 0, %s366
      %s370 = sphi 0, %s369
      %s386 = sphi 0, %s370
      %s392 = sphi 0, %s394
      %s395 = sphi 0, %s392
      %s396 = sphi 0, %s395
      %s412 = sphi 0, %s396
      %s418 = sphi 0, %s420
      %s421 = sphi 0, %s418
      %s422 = sphi 0, %s421
      %s438 = sphi 0, %s422
    $region4: #{tpu_custom_call.1} parent=1 // loop_header_branch
      %35 = sbr.rel (%p33) target = $region8
    $region5: #{tpu_custom_call.1} parent=1 // loop_body
      %s37 = ssub.s32 %s32, 1
      %s38 = ssub.s32 %s32, 2
      %s45 = sadd.s32 1, %s40
      %p46 = scmp.ge.s32.totalorder %s45, 2
      %s47 = scalar_select %p46, 0, %s45
      %s48 = sadd.s32 1, %s39
      %s49 = scalar_select %p46, %s48, %s39
      %p50 = scmp.ge.s32.totalorder %s49, 2
      %s51 = scalar_select %p50, 0, %s49
      %s52 = ssub.s32 %s39, %s51
      %p53 = scmp.eq.s32.totalorder %s52, 0
      %s55 = sadd.s32 %s54, 1
      %s56 = scalar_select %p53, %s54, %s55
      %p59 = pneg %p53
      %p60 = scmp.eq.s32.totalorder %s32, 3
      %p61 = por %p59, %p60
      %p62 = scmp.ne.s32.totalorder %s54, %s57
      %p63 = scmp.eq.s32.totalorder %s32, 0
      %p64 = por %p62, %p63
      %p65 = scmp.ne.s32.totalorder %s54, %s57
      %p66 = scmp.eq.s32.totalorder %s37, 3
      %p67 = por %p65, %p66
      %p68 = scmp.ne.s32.totalorder %s57, %s58
      %p69 = scmp.eq.s32.totalorder %s37, 0
      %p70 = por %p68, %p69
      %p71 = scmp.ne.s32.totalorder %s57, %s58
      %p72 = scmp.eq.s32.totalorder %s38, 3
      %p73 = por %p71, %p72
      %p75 = scmp.ne.s32.totalorder %s58, %s74
      %p76 = scmp.eq.s32.totalorder %s38, 0
      %p77 = por %p75, %p76
      %s78 = ssub.s32 %s39, %s51
      %p79 = scmp.eq.s32.totalorder %s78, 0
      %s81 = sadd.s32 %s80, 1
      %s82 = scalar_select %p79, %s80, %s81
      %p85 = pneg %p79
      %p86 = scmp.eq.s32.totalorder %s32, 3
      %p87 = por %p85, %p86
      %p88 = scmp.ne.s32.totalorder %s80, %s83
      %p89 = scmp.eq.s32.totalorder %s32, 0
      %p90 = por %p88, %p89
      %p91 = scmp.ne.s32.totalorder %s80, %s83
      %p92 = scmp.eq.s32.totalorder %s37, 3
      %p93 = por %p91, %p92
      %p94 = scmp.ne.s32.totalorder %s83, %s84
      %p95 = scmp.eq.s32.totalorder %s37, 0
      %p96 = por %p94, %p95
      %p97 = scmp.ne.s32.totalorder %s83, %s84
      %p98 = scmp.eq.s32.totalorder %s38, 3
      %p99 = por %p97, %p98
      %p101 = scmp.ne.s32.totalorder %s84, %s100
      %p102 = scmp.eq.s32.totalorder %s38, 0
      %p103 = por %p101, %p102
      %s104 = ssub.s32 %s40, %s47
      %p105 = scmp.eq.s32.totalorder %s104, 0
      %s107 = sadd.s32 %s106, 1
      %s108 = scalar_select %p105, %s106, %s107
      %p111 = pneg %p105
      %p112 = scmp.eq.s32.totalorder %s32, 3
      %p113 = por %p111, %p112
      %p114 = scmp.ne.s32.totalorder %s106, %s109
      %p115 = scmp.eq.s32.totalorder %s32, 0
      %p116 = por %p114, %p115
      %p117 = scmp.ne.s32.totalorder %s106, %s109
      %p118 = scmp.eq.s32.totalorder %s37, 3
      %p119 = por %p117, %p118
      %p120 = scmp.ne.s32.totalorder %s109, %s110
      %p121 = scmp.eq.s32.totalorder %s37, 0
      %p122 = por %p120, %p121
      %p123 = scmp.ne.s32.totalorder %s109, %s110
      %p124 = scmp.eq.s32.totalorder %s38, 3
      %p125 = por %p123, %p124
      %p127 = scmp.ne.s32.totalorder %s110, %s126
      %p128 = scmp.eq.s32.totalorder %s38, 0
      %p129 = por %p127, %p128
      %s130 = ssub.s32 %s40, %s47
      %p131 = scmp.eq.s32.totalorder %s130, 0
      %s133 = sadd.s32 %s132, 1
      %s134 = scalar_select %p131, %s132, %s133
      %p137 = pneg %p131
      %p138 = scmp.eq.s32.totalorder %s32, 3
      %p139 = por %p137, %p138
      %p140 = scmp.ne.s32.totalorder %s132, %s135
      %p141 = scmp.eq.s32.totalorder %s32, 0
      %p142 = por %p140, %p141
      %p143 = scmp.ne.s32.totalorder %s132, %s135
      %p144 = scmp.eq.s32.totalorder %s37, 3
      %p145 = por %p143, %p144
      %p146 = scmp.ne.s32.totalorder %s135, %s136
      %p147 = scmp.eq.s32.totalorder %s37, 0
      %p148 = por %p146, %p147
      %p149 = scmp.ne.s32.totalorder %s135, %s136
      %p150 = scmp.eq.s32.totalorder %s38, 3
      %p151 = por %p149, %p150
      %p153 = scmp.ne.s32.totalorder %s136, %s152
      %p154 = scmp.eq.s32.totalorder %s38, 0
      %p155 = por %p153, %p154
      %s156 = ssub.s32 %s40, %s47
      %p157 = scmp.eq.s32.totalorder %s156, 0
      %s159 = sadd.s32 %s158, 1
      %s160 = scalar_select %p157, %s158, %s159
      %p163 = pneg %p157
      %p164 = scmp.eq.s32.totalorder %s32, 3
      %p165 = por %p163, %p164
      %p166 = scmp.ne.s32.totalorder %s158, %s161
      %p167 = scmp.eq.s32.totalorder %s32, 0
      %p168 = por %p166, %p167
      %p169 = scmp.ne.s32.totalorder %s158, %s161
      %p170 = scmp.eq.s32.totalorder %s37, 3
      %p171 = por %p169, %p170
      %p172 = scmp.ne.s32.totalorder %s161, %s162
      %p173 = scmp.eq.s32.totalorder %s37, 0
      %p174 = por %p172, %p173
      %p175 = scmp.ne.s32.totalorder %s161, %s162
      %p176 = scmp.eq.s32.totalorder %s38, 3
      %p177 = por %p175, %p176
      %p179 = scmp.ne.s32.totalorder %s162, %s178
      %p180 = scmp.eq.s32.totalorder %s38, 0
      %p181 = por %p179, %p180
      %s182 = ssub.s32 %s40, %s47
      %p183 = scmp.eq.s32.totalorder %s182, 0
      %s185 = sadd.s32 %s184, 1
      %s186 = scalar_select %p183, %s184, %s185
      %p189 = pneg %p183
      %p190 = scmp.eq.s32.totalorder %s32, 3
      %p191 = por %p189, %p190
      %p192 = scmp.ne.s32.totalorder %s184, %s187
      %p193 = scmp.eq.s32.totalorder %s32, 0
      %p194 = por %p192, %p193
      %p195 = scmp.ne.s32.totalorder %s184, %s187
      %p196 = scmp.eq.s32.totalorder %s37, 3
      %p197 = por %p195, %p196
      %p198 = scmp.ne.s32.totalorder %s187, %s188
      %p199 = scmp.eq.s32.totalorder %s37, 0
      %p200 = por %p198, %p199
      %p201 = scmp.ne.s32.totalorder %s187, %s188
      %p202 = scmp.eq.s32.totalorder %s38, 3
      %p203 = por %p201, %p202
      %p205 = scmp.ne.s32.totalorder %s188, %s204
      %p206 = scmp.eq.s32.totalorder %s38, 0
      %p207 = por %p205, %p206
      %s208 = ssub.s32 %s40, %s47
      %p209 = scmp.eq.s32.totalorder %s208, 0
      %s211 = sadd.s32 %s210, 1
      %s212 = scalar_select %p209, %s210, %s211
      %p215 = pneg %p209
      %p216 = scmp.eq.s32.totalorder %s32, 3
      %p217 = por %p215, %p216
      %p218 = scmp.ne.s32.totalorder %s210, %s213
      %p219 = scmp.eq.s32.totalorder %s32, 0
      %p220 = por %p218, %p219
      %p221 = scmp.ne.s32.totalorder %s210, %s213
      %p222 = scmp.eq.s32.totalorder %s37, 3
      %p223 = por %p221, %p222
      %p224 = scmp.ne.s32.totalorder %s213, %s214
      %p225 = scmp.eq.s32.totalorder %s37, 0
      %p226 = por %p224, %p225
      %p227 = scmp.ne.s32.totalorder %s213, %s214
      %p228 = scmp.eq.s32.totalorder %s38, 3
      %p229 = por %p227, %p228
      %p231 = scmp.ne.s32.totalorder %s214, %s230
      %p232 = scmp.eq.s32.totalorder %s38, 0
      %p233 = por %p231, %p232
      %s234 = ssub.s32 %s40, %s47
      %p235 = scmp.eq.s32.totalorder %s234, 0
      %s237 = sadd.s32 %s236, 1
      %s238 = scalar_select %p235, %s236, %s237
      %p241 = pneg %p235
      %p242 = scmp.eq.s32.totalorder %s32, 3
      %p243 = por %p241, %p242
      %p244 = scmp.ne.s32.totalorder %s236, %s239
      %p245 = scmp.eq.s32.totalorder %s32, 0
      %p246 = por %p244, %p245
      %p247 = scmp.ne.s32.totalorder %s236, %s239
      %p248 = scmp.eq.s32.totalorder %s37, 3
      %p249 = por %p247, %p248
      %p250 = scmp.ne.s32.totalorder %s239, %s240
      %p251 = scmp.eq.s32.totalorder %s37, 0
      %p252 = por %p250, %p251
      %p253 = scmp.ne.s32.totalorder %s239, %s240
      %p254 = scmp.eq.s32.totalorder %s38, 3
      %p255 = por %p253, %p254
      %p257 = scmp.ne.s32.totalorder %s240, %s256
      %p258 = scmp.eq.s32.totalorder %s38, 0
      %p259 = por %p257, %p258
      %s260 = ssub.s32 %s40, %s47
      %p261 = scmp.eq.s32.totalorder %s260, 0
      %s263 = sadd.s32 %s262, 1
      %s264 = scalar_select %p261, %s262, %s263
      %p267 = pneg %p261
      %p268 = scmp.eq.s32.totalorder %s32, 3
      %p269 = por %p267, %p268
      %p270 = scmp.ne.s32.totalorder %s262, %s265
      %p271 = scmp.eq.s32.totalorder %s32, 0
      %p272 = por %p270, %p271
      %p273 = scmp.ne.s32.totalorder %s262, %s265
      %p274 = scmp.eq.s32.totalorder %s37, 3
      %p275 = por %p273, %p274
      %p276 = scmp.ne.s32.totalorder %s265, %s266
      %p277 = scmp.eq.s32.totalorder %s37, 0
      %p278 = por %p276, %p277
      %p279 = scmp.ne.s32.totalorder %s265, %s266
      %p280 = scmp.eq.s32.totalorder %s38, 3
      %p281 = por %p279, %p280
      %p283 = scmp.ne.s32.totalorder %s266, %s282
      %p284 = scmp.eq.s32.totalorder %s38, 0
      %p285 = por %p283, %p284
      %s286 = ssub.s32 %s40, %s47
      %p287 = scmp.eq.s32.totalorder %s286, 0
      %s289 = sadd.s32 %s288, 1
      %s290 = scalar_select %p287, %s288, %s289
      %p293 = pneg %p287
      %p294 = scmp.eq.s32.totalorder %s32, 3
      %p295 = por %p293, %p294
      %p296 = scmp.ne.s32.totalorder %s288, %s291
      %p297 = scmp.eq.s32.totalorder %s32, 0
      %p298 = por %p296, %p297
      %p299 = scmp.ne.s32.totalorder %s288, %s291
      %p300 = scmp.eq.s32.totalorder %s37, 3
      %p301 = por %p299, %p300
      %p302 = scmp.ne.s32.totalorder %s291, %s292
      %p303 = scmp.eq.s32.totalorder %s37, 0
      %p304 = por %p302, %p303
      %p305 = scmp.ne.s32.totalorder %s291, %s292
      %p306 = scmp.eq.s32.totalorder %s38, 3
      %p307 = por %p305, %p306
      %p309 = scmp.ne.s32.totalorder %s292, %s308
      %p310 = scmp.eq.s32.totalorder %s38, 0
      %p311 = por %p309, %p310
      %s312 = ssub.s32 %s40, %s47
      %p313 = scmp.eq.s32.totalorder %s312, 0
      %s315 = sadd.s32 %s314, 1
      %s316 = scalar_select %p313, %s314, %s315
      %p319 = pneg %p313
      %p320 = scmp.eq.s32.totalorder %s32, 3
      %p321 = por %p319, %p320
      %p322 = scmp.ne.s32.totalorder %s314, %s317
      %p323 = scmp.eq.s32.totalorder %s32, 0
      %p324 = por %p322, %p323
      %p325 = scmp.ne.s32.totalorder %s314, %s317
      %p326 = scmp.eq.s32.totalorder %s37, 3
      %p327 = por %p325, %p326
      %p328 = scmp.ne.s32.totalorder %s317, %s318
      %p329 = scmp.eq.s32.totalorder %s37, 0
      %p330 = por %p328, %p329
      %p331 = scmp.ne.s32.totalorder %s317, %s318
      %p332 = scmp.eq.s32.totalorder %s38, 3
      %p333 = por %p331, %p332
      %p335 = scmp.ne.s32.totalorder %s318, %s334
      %p336 = scmp.eq.s32.totalorder %s38, 0
      %p337 = por %p335, %p336
      %s338 = ssub.s32 %s40, %s47
      %p339 = scmp.eq.s32.totalorder %s338, 0
      %s341 = sadd.s32 %s340, 1
      %s342 = scalar_select %p339, %s340, %s341
      %p345 = pneg %p339
      %p346 = scmp.eq.s32.totalorder %s32, 3
      %p347 = por %p345, %p346
      %p348 = scmp.ne.s32.totalorder %s340, %s343
      %p349 = scmp.eq.s32.totalorder %s32, 0
      %p350 = por %p348, %p349
      %p351 = scmp.ne.s32.totalorder %s340, %s343
      %p352 = scmp.eq.s32.totalorder %s37, 3
      %p353 = por %p351, %p352
      %p354 = scmp.ne.s32.totalorder %s343, %s344
      %p355 = scmp.eq.s32.totalorder %s37, 0
      %p356 = por %p354, %p355
      %p357 = scmp.ne.s32.totalorder %s343, %s344
      %p358 = scmp.eq.s32.totalorder %s38, 3
      %p359 = por %p357, %p358
      %p361 = scmp.ne.s32.totalorder %s344, %s360
      %p362 = scmp.eq.s32.totalorder %s38, 0
      %p363 = por %p361, %p362
      %s364 = ssub.s32 %s40, %s47
      %p365 = scmp.eq.s32.totalorder %s364, 0
      %s367 = sadd.s32 %s366, 1
      %s368 = scalar_select %p365, %s366, %s367
      %p371 = pneg %p365
      %p372 = scmp.eq.s32.totalorder %s32, 3
      %p373 = por %p371, %p372
      %p374 = scmp.ne.s32.totalorder %s366, %s369
      %p375 = scmp.eq.s32.totalorder %s32, 0
      %p376 = por %p374, %p375
      %p377 = scmp.ne.s32.totalorder %s366, %s369
      %p378 = scmp.eq.s32.totalorder %s37, 3
      %p379 = por %p377, %p378
      %p380 = scmp.ne.s32.totalorder %s369, %s370
      %p381 = scmp.eq.s32.totalorder %s37, 0
      %p382 = por %p380, %p381
      %p383 = scmp.ne.s32.totalorder %s369, %s370
      %p384 = scmp.eq.s32.totalorder %s38, 3
      %p385 = por %p383, %p384
      %p387 = scmp.ne.s32.totalorder %s370, %s386
      %p388 = scmp.eq.s32.totalorder %s38, 0
      %p389 = por %p387, %p388
      %s390 = ssub.s32 %s40, %s47
      %p391 = scmp.eq.s32.totalorder %s390, 0
      %s393 = sadd.s32 %s392, 1
      %s394 = scalar_select %p391, %s392, %s393
      %p397 = pneg %p391
      %p398 = scmp.eq.s32.totalorder %s32, 3
      %p399 = por %p397, %p398
      %p400 = scmp.ne.s32.totalorder %s392, %s395
      %p401 = scmp.eq.s32.totalorder %s32, 0
      %p402 = por %p400, %p401
      %p403 = scmp.ne.s32.totalorder %s392, %s395
      %p404 = scmp.eq.s32.totalorder %s37, 3
      %p405 = por %p403, %p404
      %p406 = scmp.ne.s32.totalorder %s395, %s396
      %p407 = scmp.eq.s32.totalorder %s37, 0
      %p408 = por %p406, %p407
      %p409 = scmp.ne.s32.totalorder %s395, %s396
      %p410 = scmp.eq.s32.totalorder %s38, 3
      %p411 = por %p409, %p410
      %p413 = scmp.ne.s32.totalorder %s396, %s412
      %p414 = scmp.eq.s32.totalorder %s38, 0
      %p415 = por %p413, %p414
      %s416 = ssub.s32 %s39, %s51
      %p417 = scmp.eq.s32.totalorder %s416, 0
      %s419 = sadd.s32 %s418, 1
      %s420 = scalar_select %p417, %s418, %s419
      %p423 = pneg %p417
      %p424 = scmp.eq.s32.totalorder %s32, 3
      %p425 = por %p423, %p424
      %p426 = scmp.ne.s32.totalorder %s418, %s421
      %p427 = scmp.eq.s32.totalorder %s32, 0
      %p428 = por %p426, %p427
      %p429 = scmp.ne.s32.totalorder %s418, %s421
      %p430 = scmp.eq.s32.totalorder %s37, 3
      %p431 = por %p429, %p430
      %p432 = scmp.ne.s32.totalorder %s421, %s422
      %p433 = scmp.eq.s32.totalorder %s37, 0
      %p434 = por %p432, %p433
      %p435 = scmp.ne.s32.totalorder %s421, %s422
      %p436 = scmp.eq.s32.totalorder %s38, 3
      %p437 = por %p435, %p436
      %p439 = scmp.ne.s32.totalorder %s422, %s438
      %p440 = scmp.eq.s32.totalorder %s38, 0
      %p441 = por %p439, %p440
      %p442 = scmp.le.s32.totalorder 1, %s32
      %p443 = scmp.lt.s32.totalorder %s32, 5
      %p444 = pnand %p442, %p443
      %p445 = pneg %p444
      // Predicated region
      $region9: #{tpu_custom_call.1} parent=5 // pred_check
        _
      $region10: #{tpu_custom_call.1} parent=5 // pred_check_branch
        %447 = sbr.rel (%p444) target = $region12
      $region11: #{tpu_custom_call.1} parent=5 // pred_region
        %s448 = ssub.s32 %s32, 1
      $region12: #{tpu_custom_call.1} parent=5 // pred_fallthru
        _
      %p449 = scmp.lt.s32.totalorder %s32, 4
      // Predicated region
      $region13: #{tpu_custom_call.1} parent=5 // pred_check
        %p450 = pneg %p449
      $region14: #{tpu_custom_call.1} parent=5 // pred_check_branch
        %452 = sbr.rel (%p450) target = $region16
      $region15: #{tpu_custom_call.1} parent=5 // pred_region
        // Predicated region
        $region17: #{tpu_custom_call.1} parent=15 // pred_check
          %p453 = pneg %p64
        $region18: #{tpu_custom_call.1} parent=15 // pred_check_branch
          %455 = sbr.rel (%p453) target = $region20
        $region19: #{tpu_custom_call.1} parent=15 // pred_region
          %s456 = sand.u32 %s54, 1
          %s457 = scalar_lea.sflag [#allocation4], %s456
          %s458 = sand.u32 %s54, 1
          %s459 = smul.addr %s458, 8
          %s460 = scalar_lea.vmem [#allocation3], %s459
          %s462 = ssub.s32 128, 128
          %463 = vsyncadd %s457, %s462
          %s464 = smul.addr %s39, 128
          %s465 = scalar_lea.hbm %s0, %s464
          %s467 = sshll.u32 %s460, 4
          %s468 = int_to_ptr.vmem [resolvable:$true] %s467
          %470 = dma.hbm_to_vmem [thread:$0]  %s465, 128, %s468, %s457
        $region20: #{tpu_custom_call.1} parent=15 // pred_fallthru
          _
        // Predicated region
        $region21: #{tpu_custom_call.1} parent=15 // pred_check
          %p471 = pneg %p90
        $region22: #{tpu_custom_call.1} parent=15 // pred_check_branch
          %473 = sbr.rel (%p471) target = $region24
        $region23: #{tpu_custom_call.1} parent=15 // pred_region
          %p474 = scmp.lt.s32.totalorder %s39, 1
          %s475 = scalar_select %p474, %s39, 1
          %s476 = scalar_lea.vmem %s1, %s475
        $region24: #{tpu_custom_call.1} parent=15 // pred_fallthru
          _
        // Predicated region
        $region25: #{tpu_custom_call.1} parent=15 // pred_check
          %p477 = pneg %p116
        $region26: #{tpu_custom_call.1} parent=15 // pred_check_branch
          %479 = sbr.rel (%p477) target = $region28
        $region27: #{tpu_custom_call.1} parent=15 // pred_region
          %s480 = sand.u32 %s32, 1
          %s481 = scalar_lea.sflag [#allocation7], %s480
          %s482 = sand.u32 %s106, 1
          %s483 = smul.addr %s482, 192
          %s484 = scalar_lea.vmem [#allocation6], %s483
          %s486 = ssub.s32 3072, 3072
          %487 = vsyncadd %s481, %s486
          %s488 = smul.addr %s40, 48
          %s489 = smul.addr %s488, 64
          %s490 = scalar_lea.hbm %s2, %s489
          %s491 = sshll.u32 %s484, 4
          %s492 = int_to_ptr.vmem [resolvable:$true] %s491
          %497 = dma.hbm_to_vmem [thread:$0]  %s490, 3072, %s492, %s481, 192, 192, 12
        $region28: #{tpu_custom_call.1} parent=15 // pred_fallthru
          _
        // Predicated region
        $region29: #{tpu_custom_call.1} parent=15 // pred_check
          %p498 = pneg %p142
        $region30: #{tpu_custom_call.1} parent=15 // pred_check_branch
          %500 = sbr.rel (%p498) target = $region32
        $region31: #{tpu_custom_call.1} parent=15 // pred_region
          %p501 = scmp.lt.s32.totalorder %s40, 1
          %s502 = scalar_select %p501, %s40, 1
          %s503 = smul.addr %s502, 3
          %s504 = scalar_lea.vmem %s3, %s503
        $region32: #{tpu_custom_call.1} parent=15 // pred_fallthru
          _
        // Predicated region
        $region33: #{tpu_custom_call.1} parent=15 // pred_check
          %p505 = pneg %p168
        $region34: #{tpu_custom_call.1} parent=15 // pred_check_branch
          %507 = sbr.rel (%p505) target = $region36
        $region35: #{tpu_custom_call.1} parent=15 // pred_region
          %s508 = sand.u32 %s32, 1
          %s509 = scalar_lea.sflag [#allocation7], %s508
          %s510 = sand.u32 %s158, 1
          %s511 = smul.addr %s510, 64
          %s512 = scalar_lea.vmem [#allocation8], %s511
          %s514 = ssub.s32 1024, 1024
          %515 = vsyncadd %s509, %s514
          %s516 = smul.addr %s40, 16
          %s517 = smul.addr %s516, 64
          %s518 = scalar_lea.hbm %s4, %s517
          %s519 = sshll.u32 %s512, 4
          %s520 = int_to_ptr.vmem [resolvable:$true] %s519
          %525 = dma.hbm_to_vmem [thread:$0]  %s518, 1024, %s520, %s509, 64, 64, 4
        $region36: #{tpu_custom_call.1} parent=15 // pred_fallthru
          _
        // Predicated region
        $region37: #{tpu_custom_call.1} parent=15 // pred_check
          %p526 = pneg %p194
        $region38: #{tpu_custom_call.1} parent=15 // pred_check_branch
          %528 = sbr.rel (%p526) target = $region40
        $region39: #{tpu_custom_call.1} parent=15 // pred_region
          %p529 = scmp.lt.s32.totalorder %s40, 1
          %s530 = scalar_select %p529, %s40, 1
          %s531 = scalar_lea.vmem %s5, %s530
        $region40: #{tpu_custom_call.1} parent=15 // pred_fallthru
          _
        // Predicated region
        $region41: #{tpu_custom_call.1} parent=15 // pred_check
          %p532 = pneg %p220
        $region42: #{tpu_custom_call.1} parent=15 // pred_check_branch
          %534 = sbr.rel (%p532) target = $region44
        $region43: #{tpu_custom_call.1} parent=15 // pred_region
          %p535 = scmp.lt.s32.totalorder %s40, 1
          %s536 = scalar_select %p535, %s40, 1
          %s537 = scalar_lea.vmem %s6, %s536
        $region44: #{tpu_custom_call.1} parent=15 // pred_fallthru
          _
        // Predicated region
        $region45: #{tpu_custom_call.1} parent=15 // pred_check
          %p538 = pneg %p246
        $region46: #{tpu_custom_call.1} parent=15 // pred_check_branch
          %540 = sbr.rel (%p538) target = $region48
        $region47: #{tpu_custom_call.1} parent=15 // pred_region
          %p541 = scmp.lt.s32.totalorder %s40, 1
          %s542 = scalar_select %p541, %s40, 1
          %s543 = scalar_lea.vmem %s7, %s542
        $region48: #{tpu_custom_call.1} parent=15 // pred_fallthru
          _
        // Predicated region
        $region49: #{tpu_custom_call.1} parent=15 // pred_check
          %p544 = pneg %p272
        $region50: #{tpu_custom_call.1} parent=15 // pred_check_branch
          %546 = sbr.rel (%p544) target = $region52
        $region51: #{tpu_custom_call.1} parent=15 // pred_region
          %s547 = sand.u32 %s32, 1
          %s548 = scalar_lea.sflag [#allocation10], %s547
          %s549 = sand.u32 %s262, 1
          %s550 = smul.addr %s549, 64
          %s551 = scalar_lea.vmem [#allocation9], %s550
          %s553 = ssub.s32 1024, 1024
          %554 = vsyncadd %s548, %s553
          %s555 = smul.addr %s40, 16
          %s556 = smul.addr %s555, 64
          %s557 = scalar_lea.hbm %s8, %s556
          %s558 = sshll.u32 %s551, 4
          %s559 = int_to_ptr.vmem [resolvable:$true] %s558
          %564 = dma.hbm_to_vmem [thread:$0]  %s557, 1024, %s559, %s548, 64, 64, 4
        $region52: #{tpu_custom_call.1} parent=15 // pred_fallthru
          _
        // Predicated region
        $region53: #{tpu_custom_call.1} parent=15 // pred_check
          %p565 = pneg %p298
        $region54: #{tpu_custom_call.1} parent=15 // pred_check_branch
          %567 = sbr.rel (%p565) target = $region56
        $region55: #{tpu_custom_call.1} parent=15 // pred_region
          %p568 = scmp.lt.s32.totalorder %s40, 1
          %s569 = scalar_select %p568, %s40, 1
          %s570 = scalar_lea.vmem %s9, %s569
        $region56: #{tpu_custom_call.1} parent=15 // pred_fallthru
          _
        // Predicated region
        $region57: #{tpu_custom_call.1} parent=15 // pred_check
          %p571 = pneg %p324
        $region58: #{tpu_custom_call.1} parent=15 // pred_check_branch
          %573 = sbr.rel (%p571) target = $region60
        $region59: #{tpu_custom_call.1} parent=15 // pred_region
          %s574 = sand.u32 %s32, 1
          %s575 = scalar_lea.sflag [#allocation10], %s574
          %s576 = sand.u32 %s314, 1
          %s577 = smul.addr %s576, 64
          %s578 = scalar_lea.vmem [#allocation11], %s577
          %s580 = ssub.s32 1024, 1024
          %581 = vsyncadd %s575, %s580
          %s582 = smul.addr %s40, 16
          %s583 = smul.addr %s582, 64
          %s584 = scalar_lea.hbm %s10, %s583
          %s585 = sshll.u32 %s578, 4
          %s586 = int_to_ptr.vmem [resolvable:$true] %s585
          %591 = dma.hbm_to_vmem [thread:$0]  %s584, 1024, %s586, %s575, 64, 64, 4
        $region60: #{tpu_custom_call.1} parent=15 // pred_fallthru
          _
        // Predicated region
        $region61: #{tpu_custom_call.1} parent=15 // pred_check
          %p592 = pneg %p350
        $region62: #{tpu_custom_call.1} parent=15 // pred_check_branch
          %594 = sbr.rel (%p592) target = $region64
        $region63: #{tpu_custom_call.1} parent=15 // pred_region
          %p595 = scmp.lt.s32.totalorder %s40, 1
          %s596 = scalar_select %p595, %s40, 1
          %s597 = scalar_lea.vmem %s11, %s596
        $region64: #{tpu_custom_call.1} parent=15 // pred_fallthru
          _
        // Predicated region
        $region65: #{tpu_custom_call.1} parent=15 // pred_check
          %p598 = pneg %p376
        $region66: #{tpu_custom_call.1} parent=15 // pred_check_branch
          %600 = sbr.rel (%p598) target = $region68
        $region67: #{tpu_custom_call.1} parent=15 // pred_region
          %p601 = scmp.lt.s32.totalorder %s40, 1
          %s602 = scalar_select %p601, %s40, 1
          %s603 = scalar_lea.vmem %s12, %s602
        $region68: #{tpu_custom_call.1} parent=15 // pred_fallthru
          _
        // Predicated region
        $region69: #{tpu_custom_call.1} parent=15 // pred_check
          %p604 = pneg %p402
        $region70: #{tpu_custom_call.1} parent=15 // pred_check_branch
          %606 = sbr.rel (%p604) target = $region72
        $region71: #{tpu_custom_call.1} parent=15 // pred_region
          %p607 = scmp.lt.s32.totalorder %s40, 1
          %s608 = scalar_select %p607, %s40, 1
          %s609 = scalar_lea.vmem %s13, %s608
        $region72: #{tpu_custom_call.1} parent=15 // pred_fallthru
          _
      $region16: #{tpu_custom_call.1} parent=5 // pred_fallthru
        _
      %p610 = scmp.le.s32.totalorder 1, %s32
      %p611 = scmp.lt.s32.totalorder %s32, 5
      %p612 = pnand %p610, %p611
      %p613 = pneg %p612
      // Predicated region
      $region73: #{tpu_custom_call.1} parent=5 // pred_check
        _
      $region74: #{tpu_custom_call.1} parent=5 // pred_check_branch
        %615 = sbr.rel (%p612) target = $region76
      $region75: #{tpu_custom_call.1} parent=5 // pred_region
        %s616 = ssub.s32 %s32, 1
        %s617 = sand.u32 %s57, 1
        %s618 = scalar_lea.sflag [#allocation4], %s617
        %s619 = sand.u32 %s57, 1
        %s620 = smul.addr %s619, 8
        %s621 = scalar_lea.vmem [#allocation3], %s620
        // Predicated region
        $region77: #{tpu_custom_call.1} parent=75 // pred_check
          %p622 = pneg %p70
        $region78: #{tpu_custom_call.1} parent=75 // pred_check_branch
          %624 = sbr.rel (%p622) target = $region80
        $region79: #{tpu_custom_call.1} parent=75 // pred_region
          %625 = dma.done %s618, 128
        $region80: #{tpu_custom_call.1} parent=75 // pred_fallthru
          _
        %s626 = sand.u32 %s37, 1
        %s627 = scalar_lea.sflag [#allocation7], %s626
        %s628 = sand.u32 %s109, 1
        %s629 = smul.addr %s628, 192
        %s630 = scalar_lea.vmem [#allocation6], %s629
        // Predicated region
        $region81: #{tpu_custom_call.1} parent=75 // pred_check
          %p631 = pneg %p122
        $region82: #{tpu_custom_call.1} parent=75 // pred_check_branch
          %633 = sbr.rel (%p631) target = $region84
        $region83: #{tpu_custom_call.1} parent=75 // pred_region
          %634 = dma.done %s627, 3072
        $region84: #{tpu_custom_call.1} parent=75 // pred_fallthru
          _
        %s635 = sand.u32 %s37, 1
        %s636 = scalar_lea.sflag [#allocation7], %s635
        %s637 = sand.u32 %s161, 1
        %s638 = smul.addr %s637, 64
        %s639 = scalar_lea.vmem [#allocation8], %s638
        // Predicated region
        $region85: #{tpu_custom_call.1} parent=75 // pred_check
          %p640 = pneg %p174
        $region86: #{tpu_custom_call.1} parent=75 // pred_check_branch
          %642 = sbr.rel (%p640) target = $region88
        $region87: #{tpu_custom_call.1} parent=75 // pred_region
          %643 = dma.done %s636, 1024
        $region88: #{tpu_custom_call.1} parent=75 // pred_fallthru
          _
        %s644 = sand.u32 %s37, 1
        %s645 = scalar_lea.sflag [#allocation10], %s644
        %s646 = sand.u32 %s265, 1
        %s647 = smul.addr %s646, 64
        %s648 = scalar_lea.vmem [#allocation9], %s647
        // Predicated region
        $region89: #{tpu_custom_call.1} parent=75 // pred_check
          %p649 = pneg %p278
        $region90: #{tpu_custom_call.1} parent=75 // pred_check_branch
          %651 = sbr.rel (%p649) target = $region92
        $region91: #{tpu_custom_call.1} parent=75 // pred_region
          %652 = dma.done %s645, 1024
        $region92: #{tpu_custom_call.1} parent=75 // pred_fallthru
          _
        %s653 = sand.u32 %s37, 1
        %s654 = scalar_lea.sflag [#allocation10], %s653
        %s655 = sand.u32 %s317, 1
        %s656 = smul.addr %s655, 64
        %s657 = scalar_lea.vmem [#allocation11], %s656
        // Predicated region
        $region93: #{tpu_custom_call.1} parent=75 // pred_check
          %p658 = pneg %p330
        $region94: #{tpu_custom_call.1} parent=75 // pred_check_branch
          %660 = sbr.rel (%p658) target = $region96
        $region95: #{tpu_custom_call.1} parent=75 // pred_region
          %661 = dma.done %s654, 1024
        $region96: #{tpu_custom_call.1} parent=75 // pred_fallthru
          _
        %s662 = sand.u32 %s57, 1
        %s663 = scalar_lea.sflag [#allocation4], %s662
        %s664 = sand.u32 %s57, 1
        %s665 = smul.addr %s664, 8
        %s666 = scalar_lea.vmem [#allocation3], %s665
        %p667 = pneg %p70
        %p668 = pneg %p67
        %p669 = scmp.lt.s32.totalorder %s41, 1
        %s670 = scalar_select %p669, %s41, 1
        %s671 = scalar_lea.vmem %s1, %s670
        %p672 = pneg %p96
        %p673 = pneg %p93
        %s674 = sand.u32 %s37, 1
        %s675 = scalar_lea.sflag [#allocation7], %s674
        %s676 = sand.u32 %s109, 1
        %s677 = smul.addr %s676, 192
        %s678 = scalar_lea.vmem [#allocation6], %s677
        %p679 = pneg %p122
        %p680 = pneg %p119
        %p681 = scmp.lt.s32.totalorder %s42, 1
        %s682 = scalar_select %p681, %s42, 1
        %s683 = smul.addr %s682, 3
        %s684 = scalar_lea.vmem %s3, %s683
        %p685 = pneg %p148
        %p686 = pneg %p145
        %s687 = sand.u32 %s37, 1
        %s688 = scalar_lea.sflag [#allocation7], %s687
        %s689 = sand.u32 %s161, 1
        %s690 = smul.addr %s689, 64
        %s691 = scalar_lea.vmem [#allocation8], %s690
        %p692 = pneg %p174
        %p693 = pneg %p171
        %p694 = scmp.lt.s32.totalorder %s42, 1
        %s695 = scalar_select %p694, %s42, 1
        %s696 = scalar_lea.vmem %s5, %s695
        %p697 = pneg %p200
        %p698 = pneg %p197
        %p699 = scmp.lt.s32.totalorder %s42, 1
        %s700 = scalar_select %p699, %s42, 1
        %s701 = scalar_lea.vmem %s6, %s700
        %p702 = pneg %p226
        %p703 = pneg %p223
        %p704 = scmp.lt.s32.totalorder %s42, 1
        %s705 = scalar_select %p704, %s42, 1
        %s706 = scalar_lea.vmem %s7, %s705
        %p707 = pneg %p252
        %p708 = pneg %p249
        %s709 = sand.u32 %s37, 1
        %s710 = scalar_lea.sflag [#allocation10], %s709
        %s711 = sand.u32 %s265, 1
        %s712 = smul.addr %s711, 64
        %s713 = scalar_lea.vmem [#allocation9], %s712
        %p714 = pneg %p278
        %p715 = pneg %p275
        %p716 = scmp.lt.s32.totalorder %s42, 1
        %s717 = scalar_select %p716, %s42, 1
        %s718 = scalar_lea.vmem %s9, %s717
        %p719 = pneg %p304
        %p720 = pneg %p301
        %s721 = sand.u32 %s37, 1
        %s722 = scalar_lea.sflag [#allocation10], %s721
        %s723 = sand.u32 %s317, 1
        %s724 = smul.addr %s723, 64
        %s725 = scalar_lea.vmem [#allocation11], %s724
        %p726 = pneg %p330
        %p727 = pneg %p327
        %p728 = scmp.lt.s32.totalorder %s42, 1
        %s729 = scalar_select %p728, %s42, 1
        %s730 = scalar_lea.vmem %s11, %s729
        %p731 = pneg %p356
        %p732 = pneg %p353
        %p733 = scmp.lt.s32.totalorder %s42, 1
        %s734 = scalar_select %p733, %s42, 1
        %s735 = scalar_lea.vmem %s12, %s734
        %p736 = pneg %p382
        %p737 = pneg %p379
        %p738 = scmp.lt.s32.totalorder %s42, 1
        %s739 = scalar_select %p738, %s42, 1
        %s740 = scalar_lea.vmem %s13, %s739
        %p741 = pneg %p408
        %p742 = pneg %p405
        %p743 = pneg %p434
        %p744 = pneg %p431
        %s745 = sand.u32 %s421, 1
        %s746 = scalar_lea.sflag [#allocation5], %s745
        %s747 = sand.u32 %s421, 1
        %s748 = smul.addr %s747, 8
        %s749 = scalar_lea.vmem [#allocation12], %s748
        %p750 = scmp.lt.s32.totalorder %s41, 1
        %s751 = scalar_select %p750, %s41, 1
        %s752 = scalar_lea.vmem %s1, %s751
        %p753 = scmp.lt.s32.totalorder %s42, 1
        %s754 = scalar_select %p753, %s42, 1
        %s755 = smul.addr %s754, 3
        %s756 = scalar_lea.vmem %s3, %s755
        %p757 = scmp.lt.s32.totalorder %s42, 1
        %s758 = scalar_select %p757, %s42, 1
        %s759 = scalar_lea.vmem %s5, %s758
        %p760 = scmp.lt.s32.totalorder %s42, 1
        %s761 = scalar_select %p760, %s42, 1
        %s762 = scalar_lea.vmem %s6, %s761
        %p763 = scmp.lt.s32.totalorder %s42, 1
        %s764 = scalar_select %p763, %s42, 1
        %s765 = scalar_lea.vmem %s7, %s764
        %p766 = scmp.lt.s32.totalorder %s42, 1
        %s767 = scalar_select %p766, %s42, 1
        %s768 = scalar_lea.vmem %s9, %s767
        %p769 = scmp.lt.s32.totalorder %s42, 1
        %s770 = scalar_select %p769, %s42, 1
        %s771 = scalar_lea.vmem %s11, %s770
        %p772 = scmp.lt.s32.totalorder %s42, 1
        %s773 = scalar_select %p772, %s42, 1
        %s774 = scalar_lea.vmem %s12, %s773
        %p775 = scmp.lt.s32.totalorder %s42, 1
        %s776 = scalar_select %p775, %s42, 1
        %s777 = scalar_lea.vmem %s13, %s776
        %p779 = scmp.eq.s32.totalorder %s42, 0
        // Predicated region
        $region97: #{tpu_custom_call.1} parent=75 // pred_check
          %p780 = pneg %p779
        $region98: #{tpu_custom_call.1} parent=75 // pred_check_branch
          %782 = sbr.rel (%p780) target = $region100
        $region99: #{tpu_custom_call.1} parent=75 // pred_region
          %v783 = vld [vmem:[%s621] sm:$0xff]
          %784 = vst [vmem:[#allocation2] sm:$0xff] %v783
        $region100: #{tpu_custom_call.1} parent=75 // pred_fallthru
          _
        %v785 = vld [vmem:[#allocation2] sm:$0xff]
        %v786 = vpack.c.bf16 %v785, %v785
        %v787 = vlaneseq
        %v788 = vand.u32 %v787, 127
        %vm789 = vcmp.lt.s32.totalorder %v788, 32
        %v790 = vsel %vm789, 1, 0
        %v791 = vcvt.s32.f32 %v790
        %v792 = vld [vmem:[%s630] sm:$0xff]
        %v793 = vld [vmem:[%s630 + $0x8] sm:$0xf]
        %v794 = vld [vmem:[%s630 + $0xc] sm:$0xff]
        %v795 = vld [vmem:[%s630 + $0x14] sm:$0xf]
        %v796 = vld [vmem:[%s630 + $0x18] sm:$0xff]
        %v797 = vld [vmem:[%s630 + $0x20] sm:$0xf]
        %v798 = vld [vmem:[%s630 + $0x24] sm:$0xff]
        %v799 = vld [vmem:[%s630 + $0x2c] sm:$0xf]
        %v800 = vld [vmem:[%s630 + $0x30] sm:$0xff]
        %v801 = vld [vmem:[%s630 + $0x38] sm:$0xf]
        %v802 = vld [vmem:[%s630 + $0x3c] sm:$0xff]
        %v803 = vld [vmem:[%s630 + $0x44] sm:$0xf]
        %v804 = vld [vmem:[%s630 + $0x48] sm:$0xff]
        %v805 = vld [vmem:[%s630 + $0x50] sm:$0xf]
        %v806 = vld [vmem:[%s630 + $0x54] sm:$0xff]
        %v807 = vld [vmem:[%s630 + $0x5c] sm:$0xf]
        %v808 = vld [vmem:[%s630 + $0x60] sm:$0xff]
        %v809 = vld [vmem:[%s630 + $0x68] sm:$0xf]
        %v810 = vld [vmem:[%s630 + $0x6c] sm:$0xff]
        %v811 = vld [vmem:[%s630 + $0x74] sm:$0xf]
        %v812 = vld [vmem:[%s630 + $0x78] sm:$0xff]
        %v813 = vld [vmem:[%s630 + $0x80] sm:$0xf]
        %v814 = vld [vmem:[%s630 + $0x84] sm:$0xff]
        %v815 = vld [vmem:[%s630 + $0x8c] sm:$0xf]
        %v816 = vld [vmem:[%s630 + $0x90] sm:$0xff]
        %v817 = vld [vmem:[%s630 + $0x98] sm:$0xf]
        %v818 = vld [vmem:[%s630 + $0x9c] sm:$0xff]
        %v819 = vld [vmem:[%s630 + $0xa4] sm:$0xf]
        %v820 = vld [vmem:[%s630 + $0xa8] sm:$0xff]
        %v821 = vld [vmem:[%s630 + $0xb0] sm:$0xf]
        %v822 = vld [vmem:[%s630 + $0xb4] sm:$0xff]
        %v823 = vld [vmem:[%s630 + $0xbc] sm:$0xf]
        %v824 = vld [vmem:[%s756] sm:$0x7]
        %v826 = vlaneseq
        %v827 = vshrl.u32 %v826, 7
        %v828 = vsub.s32 0, %v827
        %v829 = vrot.slane %v824, %v828
        %v830 = vlaneseq
        %v831 = vshrl.u32 %v830, 7
        %v832 = vsub.s32 1, %v831
        %v833 = vrot.slane %v824, %v832
        %v834 = vlaneseq
        %v835 = vshrl.u32 %v834, 7
        %v836 = vsub.s32 2, %v835
        %v837 = vrot.slane %v824, %v836
        %v873 = vunpack.c.l.b16 %v792
        %v874 = vunpack.c.h.b16 %v792
        %v875 = vunpack.c.l.b16 %v793
        %v876 = vunpack.c.l.b16 %v794
        %v877 = vunpack.c.h.b16 %v794
        %v878 = vunpack.c.l.b16 %v795
        %v879 = vunpack.c.l.b16 %v796
        %v880 = vunpack.c.h.b16 %v796
        %v881 = vunpack.c.l.b16 %v797
        %v882 = vunpack.c.l.b16 %v798
        %v883 = vunpack.c.h.b16 %v798
        %v884 = vunpack.c.l.b16 %v799
        %v885 = vunpack.c.l.b16 %v800
        %v886 = vunpack.c.h.b16 %v800
        %v887 = vunpack.c.l.b16 %v801
        %v888 = vunpack.c.l.b16 %v802
        %v889 = vunpack.c.h.b16 %v802
        %v890 = vunpack.c.l.b16 %v803
        %v891 = vunpack.c.l.b16 %v804
        %v892 = vunpack.c.h.b16 %v804
        %v893 = vunpack.c.l.b16 %v805
        %v894 = vunpack.c.l.b16 %v806
        %v895 = vunpack.c.h.b16 %v806
        %v896 = vunpack.c.l.b16 %v807
        %v897 = vunpack.c.l.b16 %v808
        %v898 = vunpack.c.h.b16 %v808
        %v899 = vunpack.c.l.b16 %v809
        %v900 = vunpack.c.l.b16 %v810
        %v901 = vunpack.c.h.b16 %v810
        %v902 = vunpack.c.l.b16 %v811
        %v903 = vunpack.c.l.b16 %v812
        %v904 = vunpack.c.h.b16 %v812
        %v905 = vunpack.c.l.b16 %v813
        %v906 = vunpack.c.l.b16 %v814
        %v907 = vunpack.c.h.b16 %v814
        %v908 = vunpack.c.l.b16 %v815
        %v909 = vunpack.c.l.b16 %v816
        %v910 = vunpack.c.h.b16 %v816
        %v911 = vunpack.c.l.b16 %v817
        %v912 = vunpack.c.l.b16 %v818
        %v913 = vunpack.c.h.b16 %v818
        %v914 = vunpack.c.l.b16 %v819
        %v915 = vunpack.c.l.b16 %v820
        %v916 = vunpack.c.h.b16 %v820
        %v917 = vunpack.c.l.b16 %v821
        %v918 = vunpack.c.l.b16 %v822
        %v919 = vunpack.c.h.b16 %v822
        %v920 = vunpack.c.l.b16 %v823
        %v921 = vpack.c.b16 %v876, %v873
        %v922 = vpack.c.b16 %v877, %v874
        %v923 = vpack.c.b16 %v878, %v875
        %v924 = vpack.c.b16 %v882, %v879
        %v925 = vpack.c.b16 %v883, %v880
        %v926 = vpack.c.b16 %v884, %v881
        %v927 = vpack.c.b16 %v888, %v885
        %v928 = vpack.c.b16 %v889, %v886
        %v929 = vpack.c.b16 %v890, %v887
        %v930 = vpack.c.b16 %v894, %v891
        %v931 = vpack.c.b16 %v895, %v892
        %v932 = vpack.c.b16 %v896, %v893
        %v933 = vpack.c.b16 %v900, %v897
        %v934 = vpack.c.b16 %v901, %v898
        %v935 = vpack.c.b16 %v902, %v899
        %v936 = vpack.c.b16 %v906, %v903
        %v937 = vpack.c.b16 %v907, %v904
        %v938 = vpack.c.b16 %v908, %v905
        %v939 = vpack.c.b16 %v912, %v909
        %v940 = vpack.c.b16 %v913, %v910
        %v941 = vpack.c.b16 %v914, %v911
        %v942 = vpack.c.b16 %v918, %v915
        %v943 = vpack.c.b16 %v919, %v916
        %v944 = vpack.c.b16 %v920, %v917
        %969 = vmatprep.subr.bf16.mxu0 %v922
        %970 = vmatpush1.bf16.msra.mxu0 %v921
        %971 = vmatprep.subr.bf16.mxu0 %v925
        %972 = vmatpush1.bf16.msra.mxu0 %v924
        %973 = vmatprep.subr.bf16.mxu0 %v928
        %974 = vmatpush1.bf16.msra.mxu0 %v927
        %975 = vmatprep.subr.bf16.mxu0 %v931
        %976 = vmatpush1.bf16.msra.mxu0 %v930
        %977 = vmatprep.subr.bf16.mxu0 %v934
        %978 = vmatpush1.bf16.msra.mxu0 %v933
        %979 = vmatprep.subr.bf16.mxu0 %v937
        %980 = vmatpush1.bf16.msra.mxu0 %v936
        %981 = vmatprep.subr.bf16.mxu0 %v940
        %982 = vmatpush1.bf16.msra.mxu0 %v939
        %983 = vmatprep.subr.bf16.mxu0 %v943
        %984 = vmatpush1.bf16.msra.mxu0 %v942
        %985 = vmatprep.subr.bf16.mxu0 0
        %986 = vmatpush1.bf16.msra.mxu0 0
        %987 = vmatprep.subr.bf16.mxu0 0
        %988 = vmatpush1.bf16.msra.mxu0 0
        %989 = vmatprep.subr.bf16.mxu0 0
        %990 = vmatpush1.bf16.msra.mxu0 0
        %991 = vmatprep.subr.bf16.mxu0 0
        %992 = vmatpush1.bf16.msra.mxu0 0
        %993 = vmatprep.subr.bf16.mxu0 0
        %994 = vmatpush1.bf16.msra.mxu0 0
        %995 = vmatprep.subr.bf16.mxu0 0
        %996 = vmatpush1.bf16.msra.mxu0 0
        %997 = vmatprep.subr.bf16.mxu0 0
        %998 = vmatpush1.bf16.msra.mxu0 0
        %999 = vmatprep.subr.bf16.mxu0 0
        %1000 = vmatpush1.bf16.msra.mxu0 0
        %1001 = vmatprep.mubr.bf16.mxu0 0
        %1002 = vmatmul.mubr.bf16.gmra.mrb[0].mxu0 %v786
        %v1003 = vpop.f32.mrb[0].mxu0
        %v1004 = vadd.f32 %v829, %v1003
        %v1005 = vpop.f32.mrb[0].mxu0
        %v1006 = vadd.f32 %v833, %v1005
        %v1007 = vpop.f32.mrb[0].mxu0
        %v1008 = vpop.f32.mrb[0].mxu0
        %1009 = vdwg.mxu0
        %1010 = vmatprep.subr.bf16.mxu0 0
        %1011 = vmatpush1.bf16.msra.mxu0 %v923
        %1012 = vmatprep.subr.bf16.mxu0 0
        %1013 = vmatpush1.bf16.msra.mxu0 %v926
        %1014 = vmatprep.subr.bf16.mxu0 0
        %1015 = vmatpush1.bf16.msra.mxu0 %v929
        %1016 = vmatprep.subr.bf16.mxu0 0
        %1017 = vmatpush1.bf16.msra.mxu0 %v932
        %1018 = vmatprep.subr.bf16.mxu0 0
        %1019 = vmatpush1.bf16.msra.mxu0 %v935
        %1020 = vmatprep.subr.bf16.mxu0 0
        %1021 = vmatpush1.bf16.msra.mxu0 %v938
        %1022 = vmatprep.subr.bf16.mxu0 0
        %1023 = vmatpush1.bf16.msra.mxu0 %v941
        %1024 = vmatprep.subr.bf16.mxu0 0
        %1025 = vmatpush1.bf16.msra.mxu0 %v944
        %1026 = vmatprep.subr.bf16.mxu0 0
        %1027 = vmatpush1.bf16.msra.mxu0 0
        %1028 = vmatprep.subr.bf16.mxu0 0
        %1029 = vmatpush1.bf16.msra.mxu0 0
        %1030 = vmatprep.subr.bf16.mxu0 0
        %1031 = vmatpush1.bf16.msra.mxu0 0
        %1032 = vmatprep.subr.bf16.mxu0 0
        %1033 = vmatpush1.bf16.msra.mxu0 0
        %1034 = vmatprep.subr.bf16.mxu0 0
        %1035 = vmatpush1.bf16.msra.mxu0 0
        %1036 = vmatprep.subr.bf16.mxu0 0
        %1037 = vmatpush1.bf16.msra.mxu0 0
        %1038 = vmatprep.subr.bf16.mxu0 0
        %1039 = vmatpush1.bf16.msra.mxu0 0
        %1040 = vmatprep.subr.bf16.mxu0 0
        %1041 = vmatpush1.bf16.msra.mxu0 0
        %1042 = vmatprep.mubr.bf16.mxu0 0
        %1043 = vmatmul.mubr.bf16.gmra.mrb[0].mxu0 %v786
        %v1044 = vpop.f32.mrb[0].mxu0
        %v1045 = vadd.f32 %v837, %v1044
        %v1046 = vpop.f32.mrb[0].mxu0
        %v1047 = vpop.f32.mrb[0].mxu0
        %v1048 = vpop.f32.mrb[0].mxu0
        %1049 = vdwg.mxu0
        %v1050 = vpack.c.bf16 %v1004, %v1004
        %v1051 = vpack.c.bf16 %v1006, %v1006
        %v1052 = vpack.c.bf16 %v1045, %v1045
        %v1053 = vld [vmem:[%s752] sm:$0x1]
        %v1055 = vlaneseq
        %v1056 = vshrl.u32 %v1055, 7
        %v1057 = vsub.s32 0, %v1056
        %v1058 = vrot.slane %v1053, %v1057
        %vm1060 = vcmask 261120
        %v1062 = vsel %vm1060, %v1050, 0
        %v1065 = vsel %vm1060, %v1051, 0
        %1067 = vmatprep.subr.bf16.mxu0 0
        %1068 = vmatpush1.bf16.xpose.msra.mxu0 %v1065
        %1069 = vmatprep.subr.bf16.mxu0 0
        %1070 = vmatpush1.bf16.xpose.msra.mxu0 0
        %1071 = vmatprep.subr.bf16.mxu0 0
        %1072 = vmatpush1.bf16.xpose.msra.mxu0 0
        %1073 = vmatprep.subr.bf16.mxu0 0
        %1074 = vmatpush1.bf16.xpose.msra.mxu0 0
        %1075 = vmatprep.subr.bf16.mxu0 0
        %1076 = vmatpush1.bf16.xpose.msra.mxu0 0
        %1077 = vmatprep.subr.bf16.mxu0 0
        %1078 = vmatpush1.bf16.xpose.msra.mxu0 0
        %1079 = vmatprep.subr.bf16.mxu0 0
        %1080 = vmatpush1.bf16.xpose.msra.mxu0 0
        %1081 = vmatprep.subr.bf16.mxu0 0
        %1082 = vmatpush1.bf16.xpose.msra.mxu0 0
        %1083 = vmatprep.subr.bf16.mxu0 0
        %1084 = vmatpush1.bf16.xpose.msra.mxu0 0
        %1085 = vmatprep.subr.bf16.mxu0 0
        %1086 = vmatpush1.bf16.xpose.msra.mxu0 0
        %1087 = vmatprep.subr.bf16.mxu0 0
        %1088 = vmatpush1.bf16.xpose.msra.mxu0 0
        %1089 = vmatprep.subr.bf16.mxu0 0
        %1090 = vmatpush1.bf16.xpose.msra.mxu0 0
        %1091 = vmatprep.subr.bf16.mxu0 0
        %1092 = vmatpush1.bf16.xpose.msra.mxu0 0
        %1093 = vmatprep.subr.bf16.mxu0 0
        %1094 = vmatpush1.bf16.xpose.msra.mxu0 0
        %1095 = vmatprep.subr.bf16.mxu0 0
        %1096 = vmatpush1.bf16.xpose.msra.mxu0 0
        %1097 = vmatprep.subr.bf16.mxu0 0
        %1098 = vmatpush1.bf16.xpose.msra.mxu0 0
        %1099 = vmatprep.mubr.bf16.mxu0 0
        %1100 = vmatmul.mubr.bf16.gmra.mrb[0].mxu0 %v1062
        %v1101 = vpop.f32.mrb[0].mxu0
        %v1102 = vadd.f32 %v1058, %v1101
        %v1103 = vpop.f32.mrb[0].mxu0
        %v1104 = vpop.f32.mrb[0].mxu0
        %v1105 = vpop.f32.mrb[0].mxu0
        %1106 = vdwg.mxu0
        %vm1107 = vcmask 64512
        %v1108 = vsel %vm1107, %v1102, -inf
        %1109 = vmax.xlane.f32.xlu0 %v1108
        %v1110 = vpop.xlane.xlu0 %1109
        %v1111 = vsub.f32 %v1102, %v1110
        %v1112 = vmul.f32 %v1111, 1.442695
        %v1113 = vpow.pop %v1112
        %v1114 = vsel %vm1107, %v1113, 0.0
        %1115 = vadd.xlane.f32.xlu0 %v1114
        %v1116 = vpop.xlane.xlu0 %1115
        %v1117 = vrcp.pop %v1116
        %v1118 = vmul.f32 %v1113, %v1117
        %v1119 = vpack.c.bf16 %v1118, %v1118
        %v1121 = vsel %vm1107, %v1119, 0
        %vm1123 = vcmask 1043456
        %v1125 = vsel %vm1123, %v1052, 0
        %1127 = vmatprep.subr.bf16.mxu0 0
        %1128 = vmatpush1.bf16.msra.mxu0 %v1125
        %1129 = vmatprep.subr.bf16.mxu0 0
        %1130 = vmatpush1.bf16.msra.mxu0 0
        %1131 = vmatprep.subr.bf16.mxu0 0
        %1132 = vmatpush1.bf16.msra.mxu0 0
        %1133 = vmatprep.subr.bf16.mxu0 0
        %1134 = vmatpush1.bf16.msra.mxu0 0
        %1135 = vmatprep.subr.bf16.mxu0 0
        %1136 = vmatpush1.bf16.msra.mxu0 0
        %1137 = vmatprep.subr.bf16.mxu0 0
        %1138 = vmatpush1.bf16.msra.mxu0 0
        %1139 = vmatprep.subr.bf16.mxu0 0
        %1140 = vmatpush1.bf16.msra.mxu0 0
        %1141 = vmatprep.subr.bf16.mxu0 0
        %1142 = vmatpush1.bf16.msra.mxu0 0
        %1143 = vmatprep.subr.bf16.mxu0 0
        %1144 = vmatpush1.bf16.msra.mxu0 0
        %1145 = vmatprep.subr.bf16.mxu0 0
        %1146 = vmatpush1.bf16.msra.mxu0 0
        %1147 = vmatprep.subr.bf16.mxu0 0
        %1148 = vmatpush1.bf16.msra.mxu0 0
        %1149 = vmatprep.subr.bf16.mxu0 0
        %1150 = vmatpush1.bf16.msra.mxu0 0
        %1151 = vmatprep.subr.bf16.mxu0 0
        %1152 = vmatpush1.bf16.msra.mxu0 0
        %1153 = vmatprep.subr.bf16.mxu0 0
        %1154 = vmatpush1.bf16.msra.mxu0 0
        %1155 = vmatprep.subr.bf16.mxu0 0
        %1156 = vmatpush1.bf16.msra.mxu0 0
        %1157 = vmatprep.subr.bf16.mxu0 0
        %1158 = vmatpush1.bf16.msra.mxu0 0
        %1159 = vmatprep.mubr.bf16.mxu0 0
        %1160 = vmatmul.mubr.bf16.gmra.mrb[0].mxu0 %v1121
        %v1161 = vpop.f32.mrb[0].mxu0
        %v1162 = vadd.f32 0.0, %v1161
        %v1163 = vpop.f32.mrb[0].mxu0
        %v1164 = vpop.f32.mrb[0].mxu0
        %v1165 = vpop.f32.mrb[0].mxu0
        %1166 = vdwg.mxu0
        %1168 = vrot.lane.b32.xlu0 %v1050, 96
        %v1169 = vpop.permute.xlu0 %1168
        %1171 = vrot.lane.b32.xlu0 %v1051, 96
        %v1172 = vpop.permute.xlu0 %1171
        %v1174 = vsel %vm1060, %v1169, 0
        %v1177 = vsel %vm1060, %v1172, 0
        %1179 = vmatprep.subr.bf16.mxu0 0
        %1180 = vmatpush1.bf16.xpose.msra.mxu0 %v1177
        %1181 = vmatprep.subr.bf16.mxu0 0
        %1182 = vmatpush1.bf16.xpose.msra.mxu0 0
        %1183 = vmatprep.subr.bf16.mxu0 0
        %1184 = vmatpush1.bf16.xpose.msra.mxu0 0
        %1185 = vmatprep.subr.bf16.mxu0 0
        %1186 = vmatpush1.bf16.xpose.msra.mxu0 0
        %1187 = vmatprep.subr.bf16.mxu0 0
        %1188 = vmatpush1.bf16.xpose.msra.mxu0 0
        %1189 = vmatprep.subr.bf16.mxu0 0
        %1190 = vmatpush1.bf16.xpose.msra.mxu0 0
        %1191 = vmatprep.subr.bf16.mxu0 0
        %1192 = vmatpush1.bf16.xpose.msra.mxu0 0
        %1193 = vmatprep.subr.bf16.mxu0 0
        %1194 = vmatpush1.bf16.xpose.msra.mxu0 0
        %1195 = vmatprep.subr.bf16.mxu0 0
        %1196 = vmatpush1.bf16.xpose.msra.mxu0 0
        %1197 = vmatprep.subr.bf16.mxu0 0
        %1198 = vmatpush1.bf16.xpose.msra.mxu0 0
        %1199 = vmatprep.subr.bf16.mxu0 0
        %1200 = vmatpush1.bf16.xpose.msra.mxu0 0
        %1201 = vmatprep.subr.bf16.mxu0 0
        %1202 = vmatpush1.bf16.xpose.msra.mxu0 0
        %1203 = vmatprep.subr.bf16.mxu0 0
        %1204 = vmatpush1.bf16.xpose.msra.mxu0 0
        %1205 = vmatprep.subr.bf16.mxu0 0
        %1206 = vmatpush1.bf16.xpose.msra.mxu0 0
        %1207 = vmatprep.subr.bf16.mxu0 0
        %1208 = vmatpush1.bf16.xpose.msra.mxu0 0
        %1209 = vmatprep.subr.bf16.mxu0 0
        %1210 = vmatpush1.bf16.xpose.msra.mxu0 0
        %1211 = vmatprep.mubr.bf16.mxu0 0
        %1212 = vmatmul.mubr.bf16.gmra.mrb[0].mxu0 %v1174
        %v1213 = vpop.f32.mrb[0].mxu0
        %v1214 = vadd.f32 %v1058, %v1213
        %v1215 = vpop.f32.mrb[0].mxu0
        %v1216 = vpop.f32.mrb[0].mxu0
        %v1217 = vpop.f32.mrb[0].mxu0
        %1218 = vdwg.mxu0
        %v1219 = vsel %vm1107, %v1214, -inf
        %1220 = vmax.xlane.f32.xlu0 %v1219
        %v1221 = vpop.xlane.xlu0 %1220
        %v1222 = vsub.f32 %v1214, %v1221
        %v1223 = vmul.f32 %v1222, 1.442695
        %v1224 = vpow.pop %v1223
        %v1225 = vsel %vm1107, %v1224, 0.0
        %1226 = vadd.xlane.f32.xlu0 %v1225
        %v1227 = vpop.xlane.xlu0 %1226
        %v1228 = vrcp.pop %v1227
        %v1229 = vmul.f32 %v1224, %v1228
        %v1230 = vpack.c.bf16 %v1229, %v1229
        %1232 = vrot.lane.b32.xlu0 %v1052, 96
        %v1233 = vpop.permute.xlu0 %1232
        %v1235 = vsel %vm1107, %v1230, 0
        %v1238 = vsel %vm1123, %v1233, 0
        %1240 = vmatprep.subr.bf16.mxu0 0
        %1241 = vmatpush1.bf16.msra.mxu0 %v1238
        %1242 = vmatprep.subr.bf16.mxu0 0
        %1243 = vmatpush1.bf16.msra.mxu0 0
        %1244 = vmatprep.subr.bf16.mxu0 0
        %1245 = vmatpush1.bf16.msra.mxu0 0
        %1246 = vmatprep.subr.bf16.mxu0 0
        %1247 = vmatpush1.bf16.msra.mxu0 0
        %1248 = vmatprep.subr.bf16.mxu0 0
        %1249 = vmatpush1.bf16.msra.mxu0 0
        %1250 = vmatprep.subr.bf16.mxu0 0
        %1251 = vmatpush1.bf16.msra.mxu0 0
        %1252 = vmatprep.subr.bf16.mxu0 0
        %1253 = vmatpush1.bf16.msra.mxu0 0
        %1254 = vmatprep.subr.bf16.mxu0 0
        %1255 = vmatpush1.bf16.msra.mxu0 0
        %1256 = vmatprep.subr.bf16.mxu0 0
        %1257 = vmatpush1.bf16.msra.mxu0 0
        %1258 = vmatprep.subr.bf16.mxu0 0
        %1259 = vmatpush1.bf16.msra.mxu0 0
        %1260 = vmatprep.subr.bf16.mxu0 0
        %1261 = vmatpush1.bf16.msra.mxu0 0
        %1262 = vmatprep.subr.bf16.mxu0 0
        %1263 = vmatpush1.bf16.msra.mxu0 0
        %1264 = vmatprep.subr.bf16.mxu0 0
        %1265 = vmatpush1.bf16.msra.mxu0 0
        %1266 = vmatprep.subr.bf16.mxu0 0
        %1267 = vmatpush1.bf16.msra.mxu0 0
        %1268 = vmatprep.subr.bf16.mxu0 0
        %1269 = vmatpush1.bf16.msra.mxu0 0
        %1270 = vmatprep.subr.bf16.mxu0 0
        %1271 = vmatpush1.bf16.msra.mxu0 0
        %1272 = vmatprep.mubr.bf16.mxu0 0
        %1273 = vmatmul.mubr.bf16.gmra.mrb[0].mxu0 %v1235
        %v1274 = vpop.f32.mrb[0].mxu0
        %v1275 = vadd.f32 0.0, %v1274
        %v1276 = vpop.f32.mrb[0].mxu0
        %v1277 = vpop.f32.mrb[0].mxu0
        %v1278 = vpop.f32.mrb[0].mxu0
        %1279 = vdwg.mxu0
        %1280 = vrot.lane.b32.xlu0 %v1050, 64
        %v1281 = vpop.permute.xlu0 %1280
        %1282 = vrot.lane.b32.xlu0 %v1051, 64
        %v1283 = vpop.permute.xlu0 %1282
        %v1285 = vsel %vm1060, %v1281, 0
        %v1288 = vsel %vm1060, %v1283, 0
        %1290 = vmatprep.subr.bf16.mxu0 0
        %1291 = vmatpush1.bf16.xpose.msra.mxu0 %v1288
        %1292 = vmatprep.subr.bf16.mxu0 0
        %1293 = vmatpush1.bf16.xpose.msra.mxu0 0
        %1294 = vmatprep.subr.bf16.mxu0 0
        %1295 = vmatpush1.bf16.xpose.msra.mxu0 0
        %1296 = vmatprep.subr.bf16.mxu0 0
        %1297 = vmatpush1.bf16.xpose.msra.mxu0 0
        %1298 = vmatprep.subr.bf16.mxu0 0
        %1299 = vmatpush1.bf16.xpose.msra.mxu0 0
        %1300 = vmatprep.subr.bf16.mxu0 0
        %1301 = vmatpush1.bf16.xpose.msra.mxu0 0
        %1302 = vmatprep.subr.bf16.mxu0 0
        %1303 = vmatpush1.bf16.xpose.msra.mxu0 0
        %1304 = vmatprep.subr.bf16.mxu0 0
        %1305 = vmatpush1.bf16.xpose.msra.mxu0 0
        %1306 = vmatprep.subr.bf16.mxu0 0
        %1307 = vmatpush1.bf16.xpose.msra.mxu0 0
        %1308 = vmatprep.subr.bf16.mxu0 0
        %1309 = vmatpush1.bf16.xpose.msra.mxu0 0
        %1310 = vmatprep.subr.bf16.mxu0 0
        %1311 = vmatpush1.bf16.xpose.msra.mxu0 0
        %1312 = vmatprep.subr.bf16.mxu0 0
        %1313 = vmatpush1.bf16.xpose.msra.mxu0 0
        %1314 = vmatprep.subr.bf16.mxu0 0
        %1315 = vmatpush1.bf16.xpose.msra.mxu0 0
        %1316 = vmatprep.subr.bf16.mxu0 0
        %1317 = vmatpush1.bf16.xpose.msra.mxu0 0
        %1318 = vmatprep.subr.bf16.mxu0 0
        %1319 = vmatpush1.bf16.xpose.msra.mxu0 0
        %1320 = vmatprep.subr.bf16.mxu0 0
        %1321 = vmatpush1.bf16.xpose.msra.mxu0 0
        %1322 = vmatprep.mubr.bf16.mxu0 0
        %1323 = vmatmul.mubr.bf16.gmra.mrb[0].mxu0 %v1285
        %v1324 = vpop.f32.mrb[0].mxu0
        %v1325 = vadd.f32 %v1058, %v1324
        %v1326 = vpop.f32.mrb[0].mxu0
        %v1327 = vpop.f32.mrb[0].mxu0
        %v1328 = vpop.f32.mrb[0].mxu0
        %1329 = vdwg.mxu0
        %v1330 = vsel %vm1107, %v1325, -inf
        %1331 = vmax.xlane.f32.xlu0 %v1330
        %v1332 = vpop.xlane.xlu0 %1331
        %v1333 = vsub.f32 %v1325, %v1332
        %v1334 = vmul.f32 %v1333, 1.442695
        %v1335 = vpow.pop %v1334
        %v1336 = vsel %vm1107, %v1335, 0.0
        %1337 = vadd.xlane.f32.xlu0 %v1336
        %v1338 = vpop.xlane.xlu0 %1337
        %v1339 = vrcp.pop %v1338
        %v1340 = vmul.f32 %v1335, %v1339
        %v1341 = vpack.c.bf16 %v1340, %v1340
        %1342 = vrot.lane.b32.xlu0 %v1052, 64
        %v1343 = vpop.permute.xlu0 %1342
        %v1345 = vsel %vm1107, %v1341, 0
        %v1348 = vsel %vm1123, %v1343, 0
        %1350 = vmatprep.subr.bf16.mxu0 0
        %1351 = vmatpush1.bf16.msra.mxu0 %v1348
        %1352 = vmatprep.subr.bf16.mxu0 0
        %1353 = vmatpush1.bf16.msra.mxu0 0
        %1354 = vmatprep.subr.bf16.mxu0 0
        %1355 = vmatpush1.bf16.msra.mxu0 0
        %1356 = vmatprep.subr.bf16.mxu0 0
        %1357 = vmatpush1.bf16.msra.mxu0 0
        %1358 = vmatprep.subr.bf16.mxu0 0
        %1359 = vmatpush1.bf16.msra.mxu0 0
        %1360 = vmatprep.subr.bf16.mxu0 0
        %1361 = vmatpush1.bf16.msra.mxu0 0
        %1362 = vmatprep.subr.bf16.mxu0 0
        %1363 = vmatpush1.bf16.msra.mxu0 0
        %1364 = vmatprep.subr.bf16.mxu0 0
        %1365 = vmatpush1.bf16.msra.mxu0 0
        %1366 = vmatprep.subr.bf16.mxu0 0
        %1367 = vmatpush1.bf16.msra.mxu0 0
        %1368 = vmatprep.subr.bf16.mxu0 0
        %1369 = vmatpush1.bf16.msra.mxu0 0
        %1370 = vmatprep.subr.bf16.mxu0 0
        %1371 = vmatpush1.bf16.msra.mxu0 0
        %1372 = vmatprep.subr.bf16.mxu0 0
        %1373 = vmatpush1.bf16.msra.mxu0 0
        %1374 = vmatprep.subr.bf16.mxu0 0
        %1375 = vmatpush1.bf16.msra.mxu0 0
        %1376 = vmatprep.subr.bf16.mxu0 0
        %1377 = vmatpush1.bf16.msra.mxu0 0
        %1378 = vmatprep.subr.bf16.mxu0 0
        %1379 = vmatpush1.bf16.msra.mxu0 0
        %1380 = vmatprep.subr.bf16.mxu0 0
        %1381 = vmatpush1.bf16.msra.mxu0 0
        %1382 = vmatprep.mubr.bf16.mxu0 0
        %1383 = vmatmul.mubr.bf16.gmra.mrb[0].mxu0 %v1345
        %v1384 = vpop.f32.mrb[0].mxu0
        %v1385 = vadd.f32 0.0, %v1384
        %v1386 = vpop.f32.mrb[0].mxu0
        %v1387 = vpop.f32.mrb[0].mxu0
        %v1388 = vpop.f32.mrb[0].mxu0
        %1389 = vdwg.mxu0
        %1390 = vrot.lane.b32.xlu0 %v1050, 32
        %v1391 = vpop.permute.xlu0 %1390
        %1392 = vrot.lane.b32.xlu0 %v1051, 32
        %v1393 = vpop.permute.xlu0 %1392
        %v1395 = vsel %vm1060, %v1391, 0
        %v1398 = vsel %vm1060, %v1393, 0
        %1400 = vmatprep.subr.bf16.mxu0 0
        %1401 = vmatpush1.bf16.xpose.msra.mxu0 %v1398
        %1402 = vmatprep.subr.bf16.mxu0 0
        %1403 = vmatpush1.bf16.xpose.msra.mxu0 0
        %1404 = vmatprep.subr.bf16.mxu0 0
        %1405 = vmatpush1.bf16.xpose.msra.mxu0 0
        %1406 = vmatprep.subr.bf16.mxu0 0
        %1407 = vmatpush1.bf16.xpose.msra.mxu0 0
        %1408 = vmatprep.subr.bf16.mxu0 0
        %1409 = vmatpush1.bf16.xpose.msra.mxu0 0
        %1410 = vmatprep.subr.bf16.mxu0 0
        %1411 = vmatpush1.bf16.xpose.msra.mxu0 0
        %1412 = vmatprep.subr.bf16.mxu0 0
        %1413 = vmatpush1.bf16.xpose.msra.mxu0 0
        %1414 = vmatprep.subr.bf16.mxu0 0
        %1415 = vmatpush1.bf16.xpose.msra.mxu0 0
        %1416 = vmatprep.subr.bf16.mxu0 0
        %1417 = vmatpush1.bf16.xpose.msra.mxu0 0
        %1418 = vmatprep.subr.bf16.mxu0 0
        %1419 = vmatpush1.bf16.xpose.msra.mxu0 0
        %1420 = vmatprep.subr.bf16.mxu0 0
        %1421 = vmatpush1.bf16.xpose.msra.mxu0 0
        %1422 = vmatprep.subr.bf16.mxu0 0
        %1423 = vmatpush1.bf16.xpose.msra.mxu0 0
        %1424 = vmatprep.subr.bf16.mxu0 0
        %1425 = vmatpush1.bf16.xpose.msra.mxu0 0
        %1426 = vmatprep.subr.bf16.mxu0 0
        %1427 = vmatpush1.bf16.xpose.msra.mxu0 0
        %1428 = vmatprep.subr.bf16.mxu0 0
        %1429 = vmatpush1.bf16.xpose.msra.mxu0 0
        %1430 = vmatprep.subr.bf16.mxu0 0
        %1431 = vmatpush1.bf16.xpose.msra.mxu0 0
        %1432 = vmatprep.mubr.bf16.mxu0 0
        %1433 = vmatmul.mubr.bf16.gmra.mrb[0].mxu0 %v1395
        %v1434 = vpop.f32.mrb[0].mxu0
        %v1435 = vadd.f32 %v1058, %v1434
        %v1436 = vpop.f32.mrb[0].mxu0
        %v1437 = vpop.f32.mrb[0].mxu0
        %v1438 = vpop.f32.mrb[0].mxu0
        %1439 = vdwg.mxu0
        %v1440 = vsel %vm1107, %v1435, -inf
        %1441 = vmax.xlane.f32.xlu0 %v1440
        %v1442 = vpop.xlane.xlu0 %1441
        %v1443 = vsub.f32 %v1435, %v1442
        %v1444 = vmul.f32 %v1443, 1.442695
        %v1445 = vpow.pop %v1444
        %v1446 = vsel %vm1107, %v1445, 0.0
        %1447 = vadd.xlane.f32.xlu0 %v1446
        %v1448 = vpop.xlane.xlu0 %1447
        %v1449 = vrcp.pop %v1448
        %v1450 = vmul.f32 %v1445, %v1449
        %v1451 = vpack.c.bf16 %v1450, %v1450
        %1452 = vrot.lane.b32.xlu0 %v1052, 32
        %v1453 = vpop.permute.xlu0 %1452
        %v1455 = vsel %vm1107, %v1451, 0
        %v1458 = vsel %vm1123, %v1453, 0
        %1460 = vmatprep.subr.bf16.mxu0 0
        %1461 = vmatpush1.bf16.msra.mxu0 %v1458
        %1462 = vmatprep.subr.bf16.mxu0 0
        %1463 = vmatpush1.bf16.msra.mxu0 0
        %1464 = vmatprep.subr.bf16.mxu0 0
        %1465 = vmatpush1.bf16.msra.mxu0 0
        %1466 = vmatprep.subr.bf16.mxu0 0
        %1467 = vmatpush1.bf16.msra.mxu0 0
        %1468 = vmatprep.subr.bf16.mxu0 0
        %1469 = vmatpush1.bf16.msra.mxu0 0
        %1470 = vmatprep.subr.bf16.mxu0 0
        %1471 = vmatpush1.bf16.msra.mxu0 0
        %1472 = vmatprep.subr.bf16.mxu0 0
        %1473 = vmatpush1.bf16.msra.mxu0 0
        %1474 = vmatprep.subr.bf16.mxu0 0
        %1475 = vmatpush1.bf16.msra.mxu0 0
        %1476 = vmatprep.subr.bf16.mxu0 0
        %1477 = vmatpush1.bf16.msra.mxu0 0
        %1478 = vmatprep.subr.bf16.mxu0 0
        %1479 = vmatpush1.bf16.msra.mxu0 0
        %1480 = vmatprep.subr.bf16.mxu0 0
        %1481 = vmatpush1.bf16.msra.mxu0 0
        %1482 = vmatprep.subr.bf16.mxu0 0
        %1483 = vmatpush1.bf16.msra.mxu0 0
        %1484 = vmatprep.subr.bf16.mxu0 0
        %1485 = vmatpush1.bf16.msra.mxu0 0
        %1486 = vmatprep.subr.bf16.mxu0 0
        %1487 = vmatpush1.bf16.msra.mxu0 0
        %1488 = vmatprep.subr.bf16.mxu0 0
        %1489 = vmatpush1.bf16.msra.mxu0 0
        %1490 = vmatprep.subr.bf16.mxu0 0
        %1491 = vmatpush1.bf16.msra.mxu0 0
        %1492 = vmatprep.mubr.bf16.mxu0 0
        %1493 = vmatmul.mubr.bf16.gmra.mrb[0].mxu0 %v1455
        %v1494 = vpop.f32.mrb[0].mxu0
        %v1495 = vadd.f32 0.0, %v1494
        %v1496 = vpop.f32.mrb[0].mxu0
        %v1497 = vpop.f32.mrb[0].mxu0
        %v1498 = vpop.f32.mrb[0].mxu0
        %1499 = vdwg.mxu0
        %1501 = vrot.lane.b32.xlu0 %v1275, 32
        %v1502 = vpop.permute.xlu0 %1501
        %1505 = vrot.lane.b32.xlu0 %v1385, 64
        %v1506 = vpop.permute.xlu0 %1505
        %1509 = vrot.lane.b32.xlu0 %v1495, 96
        %v1510 = vpop.permute.xlu0 %1509
        %v1512 = vsel %vm1060, %v1162, %v1502
        %vm1513 = vcmask 523264
        %v1514 = vsel %vm1513, %v1512, %v1506
        %vm1515 = vcmask 785408
        %v1516 = vsel %vm1515, %v1514, %v1510
        %v1517 = vpack.c.bf16 %v1516, %v1516
        %v1518 = vld [vmem:[%s639] sm:$0xf]
        %v1519 = vld [vmem:[%s639 + $0x4] sm:$0xf]
        %v1520 = vld [vmem:[%s639 + $0x8] sm:$0xf]
        %v1521 = vld [vmem:[%s639 + $0xc] sm:$0xf]
        %v1522 = vld [vmem:[%s639 + $0x10] sm:$0xf]
        %v1523 = vld [vmem:[%s639 + $0x14] sm:$0xf]
        %v1524 = vld [vmem:[%s639 + $0x18] sm:$0xf]
        %v1525 = vld [vmem:[%s639 + $0x1c] sm:$0xf]
        %v1526 = vld [vmem:[%s639 + $0x20] sm:$0xf]
        %v1527 = vld [vmem:[%s639 + $0x24] sm:$0xf]
        %v1528 = vld [vmem:[%s639 + $0x28] sm:$0xf]
        %v1529 = vld [vmem:[%s639 + $0x2c] sm:$0xf]
        %v1530 = vld [vmem:[%s639 + $0x30] sm:$0xf]
        %v1531 = vld [vmem:[%s639 + $0x34] sm:$0xf]
        %v1532 = vld [vmem:[%s639 + $0x38] sm:$0xf]
        %v1533 = vld [vmem:[%s639 + $0x3c] sm:$0xf]
        %v1534 = vld [vmem:[%s759] sm:$0x1]
        %v1536 = vlaneseq
        %v1537 = vshrl.u32 %v1536, 7
        %v1538 = vsub.s32 0, %v1537
        %v1539 = vrot.slane %v1534, %v1538
        %v1557 = vunpack.c.l.b16 %v1518
        %v1558 = vunpack.c.l.b16 %v1519
        %v1559 = vunpack.c.l.b16 %v1520
        %v1560 = vunpack.c.l.b16 %v1521
        %v1561 = vunpack.c.l.b16 %v1522
        %v1562 = vunpack.c.l.b16 %v1523
        %v1563 = vunpack.c.l.b16 %v1524
        %v1564 = vunpack.c.l.b16 %v1525
        %v1565 = vunpack.c.l.b16 %v1526
        %v1566 = vunpack.c.l.b16 %v1527
        %v1567 = vunpack.c.l.b16 %v1528
        %v1568 = vunpack.c.l.b16 %v1529
        %v1569 = vunpack.c.l.b16 %v1530
        %v1570 = vunpack.c.l.b16 %v1531
        %v1571 = vunpack.c.l.b16 %v1532
        %v1572 = vunpack.c.l.b16 %v1533
        %v1573 = vpack.c.b16 %v1558, %v1557
        %v1574 = vpack.c.b16 %v1560, %v1559
        %v1575 = vpack.c.b16 %v1562, %v1561
        %v1576 = vpack.c.b16 %v1564, %v1563
        %v1577 = vpack.c.b16 %v1566, %v1565
        %v1578 = vpack.c.b16 %v1568, %v1567
        %v1579 = vpack.c.b16 %v1570, %v1569
        %v1580 = vpack.c.b16 %v1572, %v1571
        %1589 = vmatprep.subr.bf16.mxu0 0
        %1590 = vmatpush1.bf16.msra.mxu0 %v1573
        %1591 = vmatprep.subr.bf16.mxu0 0
        %1592 = vmatpush1.bf16.msra.mxu0 %v1574
        %1593 = vmatprep.subr.bf16.mxu0 0
        %1594 = vmatpush1.bf16.msra.mxu0 %v1575
        %1595 = vmatprep.subr.bf16.mxu0 0
        %1596 = vmatpush1.bf16.msra.mxu0 %v1576
        %1597 = vmatprep.subr.bf16.mxu0 0
        %1598 = vmatpush1.bf16.msra.mxu0 %v1577
        %1599 = vmatprep.subr.bf16.mxu0 0
        %1600 = vmatpush1.bf16.msra.mxu0 %v1578
        %1601 = vmatprep.subr.bf16.mxu0 0
        %1602 = vmatpush1.bf16.msra.mxu0 %v1579
        %1603 = vmatprep.subr.bf16.mxu0 0
        %1604 = vmatpush1.bf16.msra.mxu0 %v1580
        %1605 = vmatprep.subr.bf16.mxu0 0
        %1606 = vmatpush1.bf16.msra.mxu0 0
        %1607 = vmatprep.subr.bf16.mxu0 0
        %1608 = vmatpush1.bf16.msra.mxu0 0
        %1609 = vmatprep.subr.bf16.mxu0 0
        %1610 = vmatpush1.bf16.msra.mxu0 0
        %1611 = vmatprep.subr.bf16.mxu0 0
        %1612 = vmatpush1.bf16.msra.mxu0 0
        %1613 = vmatprep.subr.bf16.mxu0 0
        %1614 = vmatpush1.bf16.msra.mxu0 0
        %1615 = vmatprep.subr.bf16.mxu0 0
        %1616 = vmatpush1.bf16.msra.mxu0 0
        %1617 = vmatprep.subr.bf16.mxu0 0
        %1618 = vmatpush1.bf16.msra.mxu0 0
        %1619 = vmatprep.subr.bf16.mxu0 0
        %1620 = vmatpush1.bf16.msra.mxu0 0
        %1621 = vmatprep.mubr.bf16.mxu0 0
        %1622 = vmatmul.mubr.bf16.gmra.mrb[0].mxu0 %v1517
        %v1623 = vpop.f32.mrb[0].mxu0
        %v1624 = vadd.f32 %v1539, %v1623
        %v1625 = vpop.f32.mrb[0].mxu0
        %v1626 = vpop.f32.mrb[0].mxu0
        %v1627 = vpop.f32.mrb[0].mxu0
        %1628 = vdwg.mxu0
        %v1629 = vadd.f32 %v785, %v1624
        %v1630 = vld [vmem:[%s762] sm:$0x1]
        %v1631 = vld [vmem:[%s765] sm:$0x1]
        %1632 = vadd.xlane.f32.xlu0 %v1629
        %v1633 = vpop.xlane.xlu0 %1632
        %v1634 = vmul.f32 %v1633, 0.03125
        %v1635 = vsub.f32 %v1629, %v1634
        %v1636 = vmul.f32 %v1635, %v791
        %v1637 = vmul.f32 %v1636, %v1636
        %1638 = vadd.xlane.f32.xlu0 %v1637
        %v1639 = vpop.xlane.xlu0 %1638
        %v1640 = vmul.f32 %v1639, 0.03125
        %v1641 = vadd.f32 %v1640, 1e-05
        %v1642 = vrsqrt.pop %v1641
        %v1643 = vmul.f32 %v1636, %v1642
        %v1645 = vlaneseq
        %v1646 = vshrl.u32 %v1645, 7
        %v1647 = vsub.s32 0, %v1646
        %v1648 = vrot.slane %v1630, %v1647
        %v1650 = vmul.f32 %v1643, %v1648
        %v1652 = vlaneseq
        %v1653 = vshrl.u32 %v1652, 7
        %v1654 = vsub.s32 0, %v1653
        %v1655 = vrot.slane %v1631, %v1654
        %v1657 = vadd.f32 %v1650, %v1655
        %v1658 = vpack.c.bf16 %v1657, %v1657
        %v1659 = vld [vmem:[%s648] sm:$0xf]
        %v1660 = vld [vmem:[%s648 + $0x4] sm:$0xf]
        %v1661 = vld [vmem:[%s648 + $0x8] sm:$0xf]
        %v1662 = vld [vmem:[%s648 + $0xc] sm:$0xf]
        %v1663 = vld [vmem:[%s648 + $0x10] sm:$0xf]
        %v1664 = vld [vmem:[%s648 + $0x14] sm:$0xf]
        %v1665 = vld [vmem:[%s648 + $0x18] sm:$0xf]
        %v1666 = vld [vmem:[%s648 + $0x1c] sm:$0xf]
        %v1667 = vld [vmem:[%s648 + $0x20] sm:$0xf]
        %v1668 = vld [vmem:[%s648 + $0x24] sm:$0xf]
        %v1669 = vld [vmem:[%s648 + $0x28] sm:$0xf]
        %v1670 = vld [vmem:[%s648 + $0x2c] sm:$0xf]
        %v1671 = vld [vmem:[%s648 + $0x30] sm:$0xf]
        %v1672 = vld [vmem:[%s648 + $0x34] sm:$0xf]
        %v1673 = vld [vmem:[%s648 + $0x38] sm:$0xf]
        %v1674 = vld [vmem:[%s648 + $0x3c] sm:$0xf]
        %v1675 = vld [vmem:[%s768] sm:$0x1]
        %v1677 = vlaneseq
        %v1678 = vshrl.u32 %v1677, 7
        %v1679 = vsub.s32 0, %v1678
        %v1680 = vrot.slane %v1675, %v1679
        %v1698 = vunpack.c.l.b16 %v1659
        %v1699 = vunpack.c.l.b16 %v1660
        %v1700 = vunpack.c.l.b16 %v1661
        %v1701 = vunpack.c.l.b16 %v1662
        %v1702 = vunpack.c.l.b16 %v1663
        %v1703 = vunpack.c.l.b16 %v1664
        %v1704 = vunpack.c.l.b16 %v1665
        %v1705 = vunpack.c.l.b16 %v1666
        %v1706 = vunpack.c.l.b16 %v1667
        %v1707 = vunpack.c.l.b16 %v1668
        %v1708 = vunpack.c.l.b16 %v1669
        %v1709 = vunpack.c.l.b16 %v1670
        %v1710 = vunpack.c.l.b16 %v1671
        %v1711 = vunpack.c.l.b16 %v1672
        %v1712 = vunpack.c.l.b16 %v1673
        %v1713 = vunpack.c.l.b16 %v1674
        %v1714 = vpack.c.b16 %v1699, %v1698
        %v1715 = vpack.c.b16 %v1701, %v1700
        %v1716 = vpack.c.b16 %v1703, %v1702
        %v1717 = vpack.c.b16 %v1705, %v1704
        %v1718 = vpack.c.b16 %v1707, %v1706
        %v1719 = vpack.c.b16 %v1709, %v1708
        %v1720 = vpack.c.b16 %v1711, %v1710
        %v1721 = vpack.c.b16 %v1713, %v1712
        %1730 = vmatprep.subr.bf16.mxu0 0
        %1731 = vmatpush1.bf16.msra.mxu0 %v1714
        %1732 = vmatprep.subr.bf16.mxu0 0
        %1733 = vmatpush1.bf16.msra.mxu0 %v1715
        %1734 = vmatprep.subr.bf16.mxu0 0
        %1735 = vmatpush1.bf16.msra.mxu0 %v1716
        %1736 = vmatprep.subr.bf16.mxu0 0
        %1737 = vmatpush1.bf16.msra.mxu0 %v1717
        %1738 = vmatprep.subr.bf16.mxu0 0
        %1739 = vmatpush1.bf16.msra.mxu0 %v1718
        %1740 = vmatprep.subr.bf16.mxu0 0
        %1741 = vmatpush1.bf16.msra.mxu0 %v1719
        %1742 = vmatprep.subr.bf16.mxu0 0
        %1743 = vmatpush1.bf16.msra.mxu0 %v1720
        %1744 = vmatprep.subr.bf16.mxu0 0
        %1745 = vmatpush1.bf16.msra.mxu0 %v1721
        %1746 = vmatprep.subr.bf16.mxu0 0
        %1747 = vmatpush1.bf16.msra.mxu0 0
        %1748 = vmatprep.subr.bf16.mxu0 0
        %1749 = vmatpush1.bf16.msra.mxu0 0
        %1750 = vmatprep.subr.bf16.mxu0 0
        %1751 = vmatpush1.bf16.msra.mxu0 0
        %1752 = vmatprep.subr.bf16.mxu0 0
        %1753 = vmatpush1.bf16.msra.mxu0 0
        %1754 = vmatprep.subr.bf16.mxu0 0
        %1755 = vmatpush1.bf16.msra.mxu0 0
        %1756 = vmatprep.subr.bf16.mxu0 0
        %1757 = vmatpush1.bf16.msra.mxu0 0
        %1758 = vmatprep.subr.bf16.mxu0 0
        %1759 = vmatpush1.bf16.msra.mxu0 0
        %1760 = vmatprep.subr.bf16.mxu0 0
        %1761 = vmatpush1.bf16.msra.mxu0 0
        %1762 = vmatprep.mubr.bf16.mxu0 0
        %1763 = vmatmul.mubr.bf16.gmra.mrb[0].mxu0 %v1658
        %v1764 = vpop.f32.mrb[0].mxu0
        %v1765 = vadd.f32 %v1680, %v1764
        %v1766 = vpop.f32.mrb[0].mxu0
        %v1767 = vpop.f32.mrb[0].mxu0
        %v1768 = vpop.f32.mrb[0].mxu0
        %1769 = vdwg.mxu0
        %v1770 = vmax.f32 %v1765, 0.0
        %v1771 = vpack.c.bf16 %v1770, %v1770
        %v1772 = vld [vmem:[%s657] sm:$0xf]
        %v1773 = vld [vmem:[%s657 + $0x4] sm:$0xf]
        %v1774 = vld [vmem:[%s657 + $0x8] sm:$0xf]
        %v1775 = vld [vmem:[%s657 + $0xc] sm:$0xf]
        %v1776 = vld [vmem:[%s657 + $0x10] sm:$0xf]
        %v1777 = vld [vmem:[%s657 + $0x14] sm:$0xf]
        %v1778 = vld [vmem:[%s657 + $0x18] sm:$0xf]
        %v1779 = vld [vmem:[%s657 + $0x1c] sm:$0xf]
        %v1780 = vld [vmem:[%s657 + $0x20] sm:$0xf]
        %v1781 = vld [vmem:[%s657 + $0x24] sm:$0xf]
        %v1782 = vld [vmem:[%s657 + $0x28] sm:$0xf]
        %v1783 = vld [vmem:[%s657 + $0x2c] sm:$0xf]
        %v1784 = vld [vmem:[%s657 + $0x30] sm:$0xf]
        %v1785 = vld [vmem:[%s657 + $0x34] sm:$0xf]
        %v1786 = vld [vmem:[%s657 + $0x38] sm:$0xf]
        %v1787 = vld [vmem:[%s657 + $0x3c] sm:$0xf]
        %v1788 = vld [vmem:[%s771] sm:$0x1]
        %v1790 = vlaneseq
        %v1791 = vshrl.u32 %v1790, 7
        %v1792 = vsub.s32 0, %v1791
        %v1793 = vrot.slane %v1788, %v1792
        %v1811 = vunpack.c.l.b16 %v1772
        %v1812 = vunpack.c.l.b16 %v1773
        %v1813 = vunpack.c.l.b16 %v1774
        %v1814 = vunpack.c.l.b16 %v1775
        %v1815 = vunpack.c.l.b16 %v1776
        %v1816 = vunpack.c.l.b16 %v1777
        %v1817 = vunpack.c.l.b16 %v1778
        %v1818 = vunpack.c.l.b16 %v1779
        %v1819 = vunpack.c.l.b16 %v1780
        %v1820 = vunpack.c.l.b16 %v1781
        %v1821 = vunpack.c.l.b16 %v1782
        %v1822 = vunpack.c.l.b16 %v1783
        %v1823 = vunpack.c.l.b16 %v1784
        %v1824 = vunpack.c.l.b16 %v1785
        %v1825 = vunpack.c.l.b16 %v1786
        %v1826 = vunpack.c.l.b16 %v1787
        %v1827 = vpack.c.b16 %v1812, %v1811
        %v1828 = vpack.c.b16 %v1814, %v1813
        %v1829 = vpack.c.b16 %v1816, %v1815
        %v1830 = vpack.c.b16 %v1818, %v1817
        %v1831 = vpack.c.b16 %v1820, %v1819
        %v1832 = vpack.c.b16 %v1822, %v1821
        %v1833 = vpack.c.b16 %v1824, %v1823
        %v1834 = vpack.c.b16 %v1826, %v1825
        %1843 = vmatprep.subr.bf16.mxu0 0
        %1844 = vmatpush1.bf16.msra.mxu0 %v1827
        %1845 = vmatprep.subr.bf16.mxu0 0
        %1846 = vmatpush1.bf16.msra.mxu0 %v1828
        %1847 = vmatprep.subr.bf16.mxu0 0
        %1848 = vmatpush1.bf16.msra.mxu0 %v1829
        %1849 = vmatprep.subr.bf16.mxu0 0
        %1850 = vmatpush1.bf16.msra.mxu0 %v1830
        %1851 = vmatprep.subr.bf16.mxu0 0
        %1852 = vmatpush1.bf16.msra.mxu0 %v1831
        %1853 = vmatprep.subr.bf16.mxu0 0
        %1854 = vmatpush1.bf16.msra.mxu0 %v1832
        %1855 = vmatprep.subr.bf16.mxu0 0
        %1856 = vmatpush1.bf16.msra.mxu0 %v1833
        %1857 = vmatprep.subr.bf16.mxu0 0
        %1858 = vmatpush1.bf16.msra.mxu0 %v1834
        %1859 = vmatprep.subr.bf16.mxu0 0
        %1860 = vmatpush1.bf16.msra.mxu0 0
        %1861 = vmatprep.subr.bf16.mxu0 0
        %1862 = vmatpush1.bf16.msra.mxu0 0
        %1863 = vmatprep.subr.bf16.mxu0 0
        %1864 = vmatpush1.bf16.msra.mxu0 0
        %1865 = vmatprep.subr.bf16.mxu0 0
        %1866 = vmatpush1.bf16.msra.mxu0 0
        %1867 = vmatprep.subr.bf16.mxu0 0
        %1868 = vmatpush1.bf16.msra.mxu0 0
        %1869 = vmatprep.subr.bf16.mxu0 0
        %1870 = vmatpush1.bf16.msra.mxu0 0
        %1871 = vmatprep.subr.bf16.mxu0 0
        %1872 = vmatpush1.bf16.msra.mxu0 0
        %1873 = vmatprep.subr.bf16.mxu0 0
        %1874 = vmatpush1.bf16.msra.mxu0 0
        %1875 = vmatprep.mubr.bf16.mxu0 0
        %1876 = vmatmul.mubr.bf16.gmra.mrb[0].mxu0 %v1771
        %v1877 = vpop.f32.mrb[0].mxu0
        %v1878 = vadd.f32 %v1793, %v1877
        %v1879 = vpop.f32.mrb[0].mxu0
        %v1880 = vpop.f32.mrb[0].mxu0
        %v1881 = vpop.f32.mrb[0].mxu0
        %1882 = vdwg.mxu0
        %v1883 = vadd.f32 %v1657, %v1878
        %v1884 = vld [vmem:[%s774] sm:$0x1]
        %v1885 = vld [vmem:[%s777] sm:$0x1]
        %1886 = vadd.xlane.f32.xlu0 %v1883
        %v1887 = vpop.xlane.xlu0 %1886
        %v1888 = vmul.f32 %v1887, 0.03125
        %v1889 = vsub.f32 %v1883, %v1888
        %v1890 = vmul.f32 %v1889, %v791
        %v1891 = vmul.f32 %v1890, %v1890
        %1892 = vadd.xlane.f32.xlu0 %v1891
        %v1893 = vpop.xlane.xlu0 %1892
        %v1894 = vmul.f32 %v1893, 0.03125
        %v1895 = vadd.f32 %v1894, 1e-05
        %v1896 = vrsqrt.pop %v1895
        %v1897 = vmul.f32 %v1890, %v1896
        %v1899 = vlaneseq
        %v1900 = vshrl.u32 %v1899, 7
        %v1901 = vsub.s32 0, %v1900
        %v1902 = vrot.slane %v1884, %v1901
        %v1904 = vmul.f32 %v1897, %v1902
        %v1906 = vlaneseq
        %v1907 = vshrl.u32 %v1906, 7
        %v1908 = vsub.s32 0, %v1907
        %v1909 = vrot.slane %v1885, %v1908
        %v1911 = vadd.f32 %v1904, %v1909
        %1912 = vst [vmem:[#allocation2] sm:$0xff] %v1911
        %p1913 = scmp.eq.s32.totalorder %s42, 1
        // Predicated region
        $region101: #{tpu_custom_call.1} parent=75 // pred_check
          %p1914 = pneg %p1913
        $region102: #{tpu_custom_call.1} parent=75 // pred_check_branch
          %1916 = sbr.rel (%p1914) target = $region104
        $region103: #{tpu_custom_call.1} parent=75 // pred_region
          %v1917 = vld [vmem:[%s621] sm:$0xff]
          %v1918 = vld [vmem:[#allocation2] sm:$0xff]
          %v1919 = vadd.f32 %v1917, %v1918
          %1920 = vst [vmem:[%s749] sm:$0xff] %v1919
        $region104: #{tpu_custom_call.1} parent=75 // pred_fallthru
          _
        %s1921 = sand.u32 %s421, 1
        %s1922 = scalar_lea.sflag [#allocation5], %s1921
        %s1923 = sand.u32 %s421, 1
        %s1924 = smul.addr %s1923, 8
        %s1925 = scalar_lea.vmem [#allocation12], %s1924
        // Predicated region
        $region105: #{tpu_custom_call.1} parent=75 // pred_check
          %p1926 = pneg %p431
        $region106: #{tpu_custom_call.1} parent=75 // pred_check_branch
          %1928 = sbr.rel (%p1926) target = $region108
        $region107: #{tpu_custom_call.1} parent=75 // pred_region
          %s1930 = ssub.s32 128, 128
          %1931 = vsyncadd %s1922, %s1930
          %s1932 = smul.addr %s41, 128
          %s1933 = scalar_lea.hbm %s14, %s1932
          %s1935 = sshll.u32 %s1925, 4
          %s1936 = int_to_ptr.vmem [resolvable:$true] %s1935
          %1938 = dma.vmem_to_hbm [thread:$0]  %s1936, 128, %s1933, %s1922
        $region108: #{tpu_custom_call.1} parent=75 // pred_fallthru
          _
      $region76: #{tpu_custom_call.1} parent=5 // pred_fallthru
        _
      %p1939 = scmp.le.s32.totalorder 2, %s32
      // Predicated region
      $region109: #{tpu_custom_call.1} parent=5 // pred_check
        %p1940 = pneg %p1939
      $region110: #{tpu_custom_call.1} parent=5 // pred_check_branch
        %1942 = sbr.rel (%p1940) target = $region112
      $region111: #{tpu_custom_call.1} parent=5 // pred_region
        %s1943 = ssub.s32 %s32, 2
        // Predicated region
        $region113: #{tpu_custom_call.1} parent=111 // pred_check
          %p1944 = pneg %p437
        $region114: #{tpu_custom_call.1} parent=111 // pred_check_branch
          %1946 = sbr.rel (%p1944) target = $region116
        $region115: #{tpu_custom_call.1} parent=111 // pred_region
          %s1947 = sand.u32 %s422, 1
          %s1948 = scalar_lea.sflag [#allocation5], %s1947
          %s1949 = sand.u32 %s422, 1
          %s1950 = smul.addr %s1949, 8
          %s1951 = scalar_lea.vmem [#allocation12], %s1950
          %1952 = dma.done %s1948, 128
        $region116: #{tpu_custom_call.1} parent=111 // pred_fallthru
          _
      $region112: #{tpu_custom_call.1} parent=5 // pred_fallthru
        _
    $region6: #{tpu_custom_call.1} parent=1 // loop_footer
      %s36 = sadd.s32 1, %s32
    $region7: #{tpu_custom_call.1} parent=1 // loop_footer_branch
      %31 = sbr.rel target = $region3
    $region8: #{tpu_custom_call.1} parent=1 // loop_exit
      _
    %1953 = vsyncpa [#allocation4], 1
    %s1954 = scalar_lea.sflag [#allocation4], 1
    %1955 = vsyncpa %s1954, 1
    %1956 = vsyncpa [#allocation7], 1
    %s1957 = scalar_lea.sflag [#allocation7], 1
    %1958 = vsyncpa %s1957, 1
    %1959 = vsyncpa [#allocation10], 1
    %s1960 = scalar_lea.sflag [#allocation10], 1
    %1961 = vsyncpa %s1960, 1
    %1962 = vsyncpa [#allocation5], 1
    %s1963 = scalar_lea.sflag [#allocation5], 1
    %1964 = vsyncpa %s1963, 1

</llo_original>
